<compile_context>
chip_gen: v5e
topology: v5e:2x2
jax: 0.10.0
libtpu: 0.0.40
codegen_flags: <defaults>
</compile_context>

<pallas_src>
import jax
import jax.numpy as jnp
from jax.experimental import pallas as pl
from jax.experimental.pallas import tpu as pltpu

_NB = 8  # images per grid step (multiple of 8 => all in-kernel reshapes are layout no-ops)


# ------------------------------- fused kernel ------------------------------

def _fused_forward_kernel(x_ref, b1m_ref, b1t_ref, b2m_ref, b2t_ref,
                          fw1_ref, fb1_ref, fw2_ref, fb2_ref, o_ref):
    nb = _NB
    # x_ref: [28, nb, 28] bf16, layout (h, n, w)

    # ---- conv1 (1->10, k=5) + 2x2 max-pool + relu --------------------------
    # Rows are (h_out, n); the 5 kh taps are concatenated along K (K = 5*28).
    lhs1 = jnp.concatenate(
        [x_ref[kh:kh + 24, :, :].reshape(24 * nb, 28) for kh in range(5)],
        axis=1)                                                  # [24*nb, 140] bf16
    z0 = jnp.dot(lhs1, b1m_ref[0], preferred_element_type=jnp.float32)
    z1 = jnp.dot(lhs1, b1m_ref[1], preferred_element_type=jnp.float32)
    zw = jnp.maximum(z0, z1).reshape(24, nb, 120)                # max over w-pairs
    b1t = b1t_ref[...]                                           # [1, 120]
    a1 = jnp.stack(
        [jnp.maximum(jnp.maximum(zw[2 * i], zw[2 * i + 1]) + b1t, 0.0)
         for i in range(12)], axis=0)                            # [12, nb, 120] f32

    # ---- conv2 (10->20, k=5) + 2x2 max-pool + relu --------------------------
    lhs2 = jnp.concatenate(
        [a1[kh:kh + 8].reshape(8 * nb, 120) for kh in range(5)],
        axis=1).astype(jnp.bfloat16)                             # [8*nb, 600]
    y0 = jnp.dot(lhs2, b2m_ref[0], preferred_element_type=jnp.float32)
    y1 = jnp.dot(lhs2, b2m_ref[1], preferred_element_type=jnp.float32)
    yw = jnp.maximum(y0, y1).reshape(8, nb, 80)                  # max over w-pairs
    b2t = b2t_ref[...]                                           # [1, 80]
    a2_rows = [jnp.maximum(jnp.maximum(yw[2 * p], yw[2 * p + 1]) + b2t, 0.0)
               for p in range(4)]                                # 4 x [nb, 80]

    # ---- flatten (NCHW .view handled via permuted fc1 weights) + head ------
    flat = jnp.concatenate(a2_rows, axis=1).astype(jnp.bfloat16)  # [nb, 320]
    h = jnp.dot(flat, fw1_ref[...], preferred_element_type=jnp.float32)
    h = jnp.maximum(h + fb1_ref[...], 0.0).astype(jnp.bfloat16)   # [nb, 50]
    z = jnp.dot(h, fw2_ref[...], preferred_element_type=jnp.float32)
    z = z + fb2_ref[...]                                          # [nb, 10]
    zmax = jnp.max(z, axis=-1, keepdims=True)
    lse = jnp.log(jnp.sum(jnp.exp(z - zmax), axis=-1, keepdims=True)) + zmax
    o_ref[...] = (z - lse).astype(o_ref.dtype)


# ---------------------- one-time weight preprocessing -----------------------

def prepare_params(params):
    """Hoisted, done once: banded conv matrices, bias tiles, fc permutations."""
    w1, b1, w2, b2, fw1, fb1, fw2, fb2 = params
    s = jnp.arange(2)            # pool column parity
    kw = jnp.arange(5)

    # conv1: B1[s, kh*28 + w, j*10 + co] = w1[co, 0, kh, w - 2j - s] (banded, else 0)
    wv = jnp.arange(28)
    jv = jnp.arange(12)
    m1 = (wv[None, :, None, None] ==
          2 * jv[None, None, :, None] + s[:, None, None, None]
          + kw[None, None, None, :]).astype(jnp.float32)          # [2,28,12,5]
    B1 = jnp.einsum('swjk,chk->shwjc', m1, w1[:, 0])              # [2,5,28,12,10]
    B1 = B1.reshape(2, 140, 120).astype(jnp.bfloat16)
    b1t = jnp.tile(b1, 12).reshape(1, 120).astype(jnp.float32)

    # conv2: B2[s, kh*120 + j*10 + ci, j2*20 + co] = w2[co, ci, kh, j - 2*j2 - s]
    j_in = jnp.arange(12)
    j2v = jnp.arange(4)
    m2 = (j_in[None, :, None, None] ==
          2 * j2v[None, None, :, None] + s[:, None, None, None]
          + kw[None, None, None, :]).astype(jnp.float32)          # [2,12,4,5]
    B2 = jnp.einsum('sjak,oihk->shjiao', m2, w2)                  # [2,5,12,10,4,20]
    B2 = B2.reshape(2, 600, 80).astype(jnp.bfloat16)
    b2t = jnp.tile(b2, 4).reshape(1, 80).astype(jnp.float32)

    # fc1 columns permuted to the kernel's (i3, j2, c) flatten order, pre-transposed.
    fw1p = jnp.transpose(fw1.reshape(50, 20, 4, 4), (2, 3, 1, 0)).reshape(320, 50)
    fw1p = fw1p.astype(jnp.bfloat16)
    fb1r = fb1.reshape(1, 50).astype(jnp.float32)
    fw2t = fw2.T.astype(jnp.bfloat16)                             # [50, 10]
    fb2r = fb2.reshape(1, 10).astype(jnp.float32)
    return (B1, b1t, B2, b2t, fw1p, fb1r, fw2t, fb2r)


# ------------------------------ forward pass --------------------------------

@jax.jit
def neural_network_forward(x_nchw, prepared):
    B1, b1t, B2, b2t, fw1p, fb1r, fw2t, fb2r = prepared
    N = x_nchw.shape[0]
    n_pad = ((N + _NB - 1) // _NB) * _NB
    x = x_nchw[:, 0, :, :]                                        # [N, 28, 28]
    if n_pad != N:
        x = jnp.pad(x, ((0, n_pad - N), (0, 0), (0, 0)))
    xt = jnp.transpose(x, (1, 0, 2)).astype(jnp.bfloat16)         # [28, n_pad, 28] (h, n, w)

    out = pl.pallas_call(
        _fused_forward_kernel,
        out_shape=jax.ShapeDtypeStruct((n_pad, 10), jnp.float32),
        grid_spec=pltpu.PrefetchScalarGridSpec(
            num_scalar_prefetch=0,
            grid=(n_pad // _NB,),
            in_specs=[
                pl.BlockSpec((28, _NB, 28), lambda b: (0, b, 0)),   # input block
                pl.BlockSpec((2, 140, 120), lambda b: (0, 0, 0)),   # B1
                pl.BlockSpec((1, 120), lambda b: (0, 0)),           # b1 tiled
                pl.BlockSpec((2, 600, 80), lambda b: (0, 0, 0)),    # B2
                pl.BlockSpec((1, 80), lambda b: (0, 0)),            # b2 tiled
                pl.BlockSpec((320, 50), lambda b: (0, 0)),          # fc1 (permuted)
                pl.BlockSpec((1, 50), lambda b: (0, 0)),            # fc1 bias
                pl.BlockSpec((50, 10), lambda b: (0, 0)),           # fc2^T
                pl.BlockSpec((1, 10), lambda b: (0, 0)),            # fc2 bias
            ],
            out_specs=pl.BlockSpec((_NB, 10), lambda b: (b, 0)),
        ),
        compiler_params=pltpu.CompilerParams(
            dimension_semantics=("parallel",)),
    )(xt, B1, b1t, B2, b2t, fw1p, fb1r, fw2t, fb2r)
    return out[:N]


# ------------------------------ params / reference --------------------------

def init_params(key):
    ks = jax.random.split(key, 8)
    w1 = jax.random.normal(ks[0], (10, 1, 5, 5), jnp.float32) * 0.10    # conv1
    b1 = jax.random.normal(ks[1], (10,), jnp.float32) * 0.10
    w2 = jax.random.normal(ks[2], (20, 10, 5, 5), jnp.float32) * 0.05   # conv2
    b2 = jax.random.normal(ks[3], (20,), jnp.float32) * 0.05
    fw1 = jax.random.normal(ks[4], (50, 320), jnp.float32) * 0.05       # fc1
    fb1 = jax.random.normal(ks[5], (50,), jnp.float32) * 0.05
    fw2 = jax.random.normal(ks[6], (10, 50), jnp.float32) * 0.10        # fc2
    fb2 = jax.random.normal(ks[7], (10,), jnp.float32) * 0.10
    return (w1, b1, w2, b2, fw1, fb1, fw2, fb2)


def _reference_forward(x_nchw, params):
    # Pure-JAX f32 reference of the PyTorch module (eval mode).
    w1, b1, w2, b2, fw1, fb1, fw2, fb2 = params
    n = x_nchw.shape[0]
    c1 = jax.lax.conv_general_dilated(
        x_nchw, w1, (1, 1), 'VALID',
        dimension_numbers=('NCHW', 'OIHW', 'NCHW')) + b1[None, :, None, None]
    a1 = jnp.maximum(jnp.max(c1.reshape(n, 10, 12, 2, 12, 2), axis=(3, 5)), 0.0)
    c2 = jax.lax.conv_general_dilated(
        a1, w2, (1, 1), 'VALID',
        dimension_numbers=('NCHW', 'OIHW', 'NCHW')) + b2[None, :, None, None]
    a2 = jnp.maximum(jnp.max(c2.reshape(n, 20, 4, 2, 4, 2), axis=(3, 5)), 0.0)
    flat = a2.reshape(n, 320)
    h = jnp.maximum(flat @ fw1.T + fb1, 0.0)
    z = h @ fw2.T + fb2
    return jax.nn.log_softmax(z, axis=-1)


if __name__ == "__main__":
    key = jax.random.PRNGKey(0)
    k_x, k_p = jax.random.split(key)
    # fc1 expects 320 = 20*4*4 features, which implies 28x28 single-channel input.
    x = jax.random.normal(k_x, (2, 1, 28, 28), jnp.float32)
    params = init_params(k_p)
    prepared = prepare_params(params)        # hoisted, done once

    out = neural_network_forward(x, prepared)
    out = jax.block_until_ready(out)
    assert out.shape == (2, 10)
    assert bool(jnp.all(jnp.isfinite(out)))

    ref = _reference_forward(x, params)
    err = float(jnp.max(jnp.abs(out - ref)))
    assert err < 0.1, f"mismatch vs reference: max abs err = {err}"
    print("KERNEL_OK")
</pallas_src>

<mosaic_0001>
module attributes {stable_mosaic.version = 11 : i64} {
  func.func @_fused_forward_kernel(%arg0: i32, %arg1: memref<28x8x28xbf16, #tpu.memory_space<vmem>>, %arg2: memref<2x140x120xbf16, #tpu.memory_space<vmem>>, %arg3: memref<1x120xf32, #tpu.memory_space<vmem>>, %arg4: memref<2x600x80xbf16, #tpu.memory_space<vmem>>, %arg5: memref<1x80xf32, #tpu.memory_space<vmem>>, %arg6: memref<320x50xbf16, #tpu.memory_space<vmem>>, %arg7: memref<1x50xf32, #tpu.memory_space<vmem>>, %arg8: memref<50x10xbf16, #tpu.memory_space<vmem>>, %arg9: memref<1x10xf32, #tpu.memory_space<vmem>>, %arg10: memref<8x10xf32, #tpu.memory_space<vmem>>) attributes {dimension_semantics = [#tpu.dimension_semantics<parallel>], iteration_bounds = array<i64: 1>, scalar_prefetch = 0 : i64, scratch_operands = 0 : i64, tpu.core_type = #tpu.core_type<tc>, window_params = [{transform_indices = @transform_0, window_bounds = array<i64: 28, 8, 28>}, {pipeline_mode = #tpu.pipeline_mode<synchronous>, transform_indices = @transform_1, window_bounds = array<i64: 2, 140, 120>}, {pipeline_mode = #tpu.pipeline_mode<synchronous>, transform_indices = @transform_2, window_bounds = array<i64: 1, 120>}, {pipeline_mode = #tpu.pipeline_mode<synchronous>, transform_indices = @transform_3, window_bounds = array<i64: 2, 600, 80>}, {pipeline_mode = #tpu.pipeline_mode<synchronous>, transform_indices = @transform_4, window_bounds = array<i64: 1, 80>}, {pipeline_mode = #tpu.pipeline_mode<synchronous>, transform_indices = @transform_5, window_bounds = array<i64: 320, 50>}, {pipeline_mode = #tpu.pipeline_mode<synchronous>, transform_indices = @transform_6, window_bounds = array<i64: 1, 50>}, {pipeline_mode = #tpu.pipeline_mode<synchronous>, transform_indices = @transform_7, window_bounds = array<i64: 50, 10>}, {pipeline_mode = #tpu.pipeline_mode<synchronous>, transform_indices = @transform_8, window_bounds = array<i64: 1, 10>}, {transform_indices = @transform_9, window_bounds = array<i64: 8, 10>}]} {
    %c0 = arith.constant 0 : index
    %c0_0 = arith.constant 0 : index
    %c0_1 = arith.constant 0 : index
    %0 = vector.load %arg1[%c0, %c0_0, %c0_1] : memref<28x8x28xbf16, #tpu.memory_space<vmem>>, vector<24x8x28xbf16>
    %1 = vector.shape_cast %0 : vector<24x8x28xbf16> to vector<192x28xbf16>
    %c1 = arith.constant 1 : index
    %c0_2 = arith.constant 0 : index
    %c0_3 = arith.constant 0 : index
    %2 = vector.load %arg1[%c1, %c0_2, %c0_3] : memref<28x8x28xbf16, #tpu.memory_space<vmem>>, vector<24x8x28xbf16>
    %3 = vector.shape_cast %2 : vector<24x8x28xbf16> to vector<192x28xbf16>
    %c2 = arith.constant 2 : index
    %c0_4 = arith.constant 0 : index
    %c0_5 = arith.constant 0 : index
    %4 = vector.load %arg1[%c2, %c0_4, %c0_5] : memref<28x8x28xbf16, #tpu.memory_space<vmem>>, vector<24x8x28xbf16>
    %5 = vector.shape_cast %4 : vector<24x8x28xbf16> to vector<192x28xbf16>
    %c3 = arith.constant 3 : index
    %c0_6 = arith.constant 0 : index
    %c0_7 = arith.constant 0 : index
    %6 = vector.load %arg1[%c3, %c0_6, %c0_7] : memref<28x8x28xbf16, #tpu.memory_space<vmem>>, vector<24x8x28xbf16>
    %7 = vector.shape_cast %6 : vector<24x8x28xbf16> to vector<192x28xbf16>
    %c4 = arith.constant 4 : index
    %c0_8 = arith.constant 0 : index
    %c0_9 = arith.constant 0 : index
    %8 = vector.load %arg1[%c4, %c0_8, %c0_9] : memref<28x8x28xbf16, #tpu.memory_space<vmem>>, vector<24x8x28xbf16>
    %9 = vector.shape_cast %8 : vector<24x8x28xbf16> to vector<192x28xbf16>
    %10 = tpu.concatenate %1, %3, %5, %7, %9 in 1 : vector<192x28xbf16>, vector<192x28xbf16>, vector<192x28xbf16>, vector<192x28xbf16>, vector<192x28xbf16> -> vector<192x140xbf16>
    %c0_10 = arith.constant 0 : index
    %c0_11 = arith.constant 0 : index
    %c0_12 = arith.constant 0 : index
    %11 = vector.load %arg2[%c0_10, %c0_11, %c0_12] : memref<2x140x120xbf16, #tpu.memory_space<vmem>>, vector<1x140x120xbf16>
    %12 = vector.shape_cast %11 : vector<1x140x120xbf16> to vector<140x120xbf16>
    %cst = arith.constant dense<0.000000e+00> : vector<192x120xf32>
    %13 = tpu.matmul %10, %12, %cst {dimension_numbers = #tpu.dot_dimension_numbers<[1], [0], [0], [1], [0, 0, 1, 1], [], []>} : vector<192x140xbf16>, vector<140x120xbf16>, vector<192x120xf32> -> vector<192x120xf32>
    %c1_13 = arith.constant 1 : index
    %c0_14 = arith.constant 0 : index
    %c0_15 = arith.constant 0 : index
    %14 = vector.load %arg2[%c1_13, %c0_14, %c0_15] : memref<2x140x120xbf16, #tpu.memory_space<vmem>>, vector<1x140x120xbf16>
    %15 = vector.shape_cast %14 : vector<1x140x120xbf16> to vector<140x120xbf16>
    %cst_16 = arith.constant dense<0.000000e+00> : vector<192x120xf32>
    %16 = tpu.matmul %10, %15, %cst_16 {dimension_numbers = #tpu.dot_dimension_numbers<[1], [0], [0], [1], [0, 0, 1, 1], [], []>} : vector<192x140xbf16>, vector<140x120xbf16>, vector<192x120xf32> -> vector<192x120xf32>
    %17 = arith.maximumf %13, %16 : vector<192x120xf32>
    %18 = vector.shape_cast %17 : vector<192x120xf32> to vector<24x8x120xf32>
    %c0_17 = arith.constant 0 : index
    %c0_18 = arith.constant 0 : index
    %19 = vector.load %arg3[%c0_17, %c0_18] : memref<1x120xf32, #tpu.memory_space<vmem>>, vector<1x120xf32>
    %20 = vector.extract_strided_slice %18 {offsets = [0, 0, 0], sizes = [1, 8, 120], strides = [1, 1, 1]} : vector<24x8x120xf32> to vector<1x8x120xf32>
    %21 = vector.shape_cast %20 : vector<1x8x120xf32> to vector<8x120xf32>
    %22 = vector.extract_strided_slice %18 {offsets = [1, 0, 0], sizes = [1, 8, 120], strides = [1, 1, 1]} : vector<24x8x120xf32> to vector<1x8x120xf32>
    %23 = vector.shape_cast %22 : vector<1x8x120xf32> to vector<8x120xf32>
    %24 = arith.maximumf %21, %23 : vector<8x120xf32>
    %25 = vector.broadcast %19 : vector<1x120xf32> to vector<8x120xf32>
    %26 = arith.addf %24, %25 : vector<8x120xf32>
    %cst_19 = arith.constant 0.000000e+00 : f32
    %27 = vector.broadcast %cst_19 : f32 to vector<8x120xf32>
    %28 = arith.maximumf %26, %27 : vector<8x120xf32>
    %29 = vector.extract_strided_slice %18 {offsets = [2, 0, 0], sizes = [1, 8, 120], strides = [1, 1, 1]} : vector<24x8x120xf32> to vector<1x8x120xf32>
    %30 = vector.shape_cast %29 : vector<1x8x120xf32> to vector<8x120xf32>
    %31 = vector.extract_strided_slice %18 {offsets = [3, 0, 0], sizes = [1, 8, 120], strides = [1, 1, 1]} : vector<24x8x120xf32> to vector<1x8x120xf32>
    %32 = vector.shape_cast %31 : vector<1x8x120xf32> to vector<8x120xf32>
    %33 = arith.maximumf %30, %32 : vector<8x120xf32>
    %34 = vector.broadcast %19 : vector<1x120xf32> to vector<8x120xf32>
    %35 = arith.addf %33, %34 : vector<8x120xf32>
    %cst_20 = arith.constant 0.000000e+00 : f32
    %36 = vector.broadcast %cst_20 : f32 to vector<8x120xf32>
    %37 = arith.maximumf %35, %36 : vector<8x120xf32>
    %38 = vector.extract_strided_slice %18 {offsets = [4, 0, 0], sizes = [1, 8, 120], strides = [1, 1, 1]} : vector<24x8x120xf32> to vector<1x8x120xf32>
    %39 = vector.shape_cast %38 : vector<1x8x120xf32> to vector<8x120xf32>
    %40 = vector.extract_strided_slice %18 {offsets = [5, 0, 0], sizes = [1, 8, 120], strides = [1, 1, 1]} : vector<24x8x120xf32> to vector<1x8x120xf32>
    %41 = vector.shape_cast %40 : vector<1x8x120xf32> to vector<8x120xf32>
    %42 = arith.maximumf %39, %41 : vector<8x120xf32>
    %43 = vector.broadcast %19 : vector<1x120xf32> to vector<8x120xf32>
    %44 = arith.addf %42, %43 : vector<8x120xf32>
    %cst_21 = arith.constant 0.000000e+00 : f32
    %45 = vector.broadcast %cst_21 : f32 to vector<8x120xf32>
    %46 = arith.maximumf %44, %45 : vector<8x120xf32>
    %47 = vector.extract_strided_slice %18 {offsets = [6, 0, 0], sizes = [1, 8, 120], strides = [1, 1, 1]} : vector<24x8x120xf32> to vector<1x8x120xf32>
    %48 = vector.shape_cast %47 : vector<1x8x120xf32> to vector<8x120xf32>
    %49 = vector.extract_strided_slice %18 {offsets = [7, 0, 0], sizes = [1, 8, 120], strides = [1, 1, 1]} : vector<24x8x120xf32> to vector<1x8x120xf32>
    %50 = vector.shape_cast %49 : vector<1x8x120xf32> to vector<8x120xf32>
    %51 = arith.maximumf %48, %50 : vector<8x120xf32>
    %52 = vector.broadcast %19 : vector<1x120xf32> to vector<8x120xf32>
    %53 = arith.addf %51, %52 : vector<8x120xf32>
    %cst_22 = arith.constant 0.000000e+00 : f32
    %54 = vector.broadcast %cst_22 : f32 to vector<8x120xf32>
    %55 = arith.maximumf %53, %54 : vector<8x120xf32>
    %56 = vector.extract_strided_slice %18 {offsets = [8, 0, 0], sizes = [1, 8, 120], strides = [1, 1, 1]} : vector<24x8x120xf32> to vector<1x8x120xf32>
    %57 = vector.shape_cast %56 : vector<1x8x120xf32> to vector<8x120xf32>
    %58 = vector.extract_strided_slice %18 {offsets = [9, 0, 0], sizes = [1, 8, 120], strides = [1, 1, 1]} : vector<24x8x120xf32> to vector<1x8x120xf32>
    %59 = vector.shape_cast %58 : vector<1x8x120xf32> to vector<8x120xf32>
    %60 = arith.maximumf %57, %59 : vector<8x120xf32>
    %61 = vector.broadcast %19 : vector<1x120xf32> to vector<8x120xf32>
    %62 = arith.addf %60, %61 : vector<8x120xf32>
    %cst_23 = arith.constant 0.000000e+00 : f32
    %63 = vector.broadcast %cst_23 : f32 to vector<8x120xf32>
    %64 = arith.maximumf %62, %63 : vector<8x120xf32>
    %65 = vector.extract_strided_slice %18 {offsets = [10, 0, 0], sizes = [1, 8, 120], strides = [1, 1, 1]} : vector<24x8x120xf32> to vector<1x8x120xf32>
    %66 = vector.shape_cast %65 : vector<1x8x120xf32> to vector<8x120xf32>
    %67 = vector.extract_strided_slice %18 {offsets = [11, 0, 0], sizes = [1, 8, 120], strides = [1, 1, 1]} : vector<24x8x120xf32> to vector<1x8x120xf32>
    %68 = vector.shape_cast %67 : vector<1x8x120xf32> to vector<8x120xf32>
    %69 = arith.maximumf %66, %68 : vector<8x120xf32>
    %70 = vector.broadcast %19 : vector<1x120xf32> to vector<8x120xf32>
    %71 = arith.addf %69, %70 : vector<8x120xf32>
    %cst_24 = arith.constant 0.000000e+00 : f32
    %72 = vector.broadcast %cst_24 : f32 to vector<8x120xf32>
    %73 = arith.maximumf %71, %72 : vector<8x120xf32>
    %74 = vector.extract_strided_slice %18 {offsets = [12, 0, 0], sizes = [1, 8, 120], strides = [1, 1, 1]} : vector<24x8x120xf32> to vector<1x8x120xf32>
    %75 = vector.shape_cast %74 : vector<1x8x120xf32> to vector<8x120xf32>
    %76 = vector.extract_strided_slice %18 {offsets = [13, 0, 0], sizes = [1, 8, 120], strides = [1, 1, 1]} : vector<24x8x120xf32> to vector<1x8x120xf32>
    %77 = vector.shape_cast %76 : vector<1x8x120xf32> to vector<8x120xf32>
    %78 = arith.maximumf %75, %77 : vector<8x120xf32>
    %79 = vector.broadcast %19 : vector<1x120xf32> to vector<8x120xf32>
    %80 = arith.addf %78, %79 : vector<8x120xf32>
    %cst_25 = arith.constant 0.000000e+00 : f32
    %81 = vector.broadcast %cst_25 : f32 to vector<8x120xf32>
    %82 = arith.maximumf %80, %81 : vector<8x120xf32>
    %83 = vector.extract_strided_slice %18 {offsets = [14, 0, 0], sizes = [1, 8, 120], strides = [1, 1, 1]} : vector<24x8x120xf32> to vector<1x8x120xf32>
    %84 = vector.shape_cast %83 : vector<1x8x120xf32> to vector<8x120xf32>
    %85 = vector.extract_strided_slice %18 {offsets = [15, 0, 0], sizes = [1, 8, 120], strides = [1, 1, 1]} : vector<24x8x120xf32> to vector<1x8x120xf32>
    %86 = vector.shape_cast %85 : vector<1x8x120xf32> to vector<8x120xf32>
    %87 = arith.maximumf %84, %86 : vector<8x120xf32>
    %88 = vector.broadcast %19 : vector<1x120xf32> to vector<8x120xf32>
    %89 = arith.addf %87, %88 : vector<8x120xf32>
    %cst_26 = arith.constant 0.000000e+00 : f32
    %90 = vector.broadcast %cst_26 : f32 to vector<8x120xf32>
    %91 = arith.maximumf %89, %90 : vector<8x120xf32>
    %92 = vector.extract_strided_slice %18 {offsets = [16, 0, 0], sizes = [1, 8, 120], strides = [1, 1, 1]} : vector<24x8x120xf32> to vector<1x8x120xf32>
    %93 = vector.shape_cast %92 : vector<1x8x120xf32> to vector<8x120xf32>
    %94 = vector.extract_strided_slice %18 {offsets = [17, 0, 0], sizes = [1, 8, 120], strides = [1, 1, 1]} : vector<24x8x120xf32> to vector<1x8x120xf32>
    %95 = vector.shape_cast %94 : vector<1x8x120xf32> to vector<8x120xf32>
    %96 = arith.maximumf %93, %95 : vector<8x120xf32>
    %97 = vector.broadcast %19 : vector<1x120xf32> to vector<8x120xf32>
    %98 = arith.addf %96, %97 : vector<8x120xf32>
    %cst_27 = arith.constant 0.000000e+00 : f32
    %99 = vector.broadcast %cst_27 : f32 to vector<8x120xf32>
    %100 = arith.maximumf %98, %99 : vector<8x120xf32>
    %101 = vector.extract_strided_slice %18 {offsets = [18, 0, 0], sizes = [1, 8, 120], strides = [1, 1, 1]} : vector<24x8x120xf32> to vector<1x8x120xf32>
    %102 = vector.shape_cast %101 : vector<1x8x120xf32> to vector<8x120xf32>
    %103 = vector.extract_strided_slice %18 {offsets = [19, 0, 0], sizes = [1, 8, 120], strides = [1, 1, 1]} : vector<24x8x120xf32> to vector<1x8x120xf32>
    %104 = vector.shape_cast %103 : vector<1x8x120xf32> to vector<8x120xf32>
    %105 = arith.maximumf %102, %104 : vector<8x120xf32>
    %106 = vector.broadcast %19 : vector<1x120xf32> to vector<8x120xf32>
    %107 = arith.addf %105, %106 : vector<8x120xf32>
    %cst_28 = arith.constant 0.000000e+00 : f32
    %108 = vector.broadcast %cst_28 : f32 to vector<8x120xf32>
    %109 = arith.maximumf %107, %108 : vector<8x120xf32>
    %110 = vector.extract_strided_slice %18 {offsets = [20, 0, 0], sizes = [1, 8, 120], strides = [1, 1, 1]} : vector<24x8x120xf32> to vector<1x8x120xf32>
    %111 = vector.shape_cast %110 : vector<1x8x120xf32> to vector<8x120xf32>
    %112 = vector.extract_strided_slice %18 {offsets = [21, 0, 0], sizes = [1, 8, 120], strides = [1, 1, 1]} : vector<24x8x120xf32> to vector<1x8x120xf32>
    %113 = vector.shape_cast %112 : vector<1x8x120xf32> to vector<8x120xf32>
    %114 = arith.maximumf %111, %113 : vector<8x120xf32>
    %115 = vector.broadcast %19 : vector<1x120xf32> to vector<8x120xf32>
    %116 = arith.addf %114, %115 : vector<8x120xf32>
    %cst_29 = arith.constant 0.000000e+00 : f32
    %117 = vector.broadcast %cst_29 : f32 to vector<8x120xf32>
    %118 = arith.maximumf %116, %117 : vector<8x120xf32>
    %119 = vector.extract_strided_slice %18 {offsets = [22, 0, 0], sizes = [1, 8, 120], strides = [1, 1, 1]} : vector<24x8x120xf32> to vector<1x8x120xf32>
    %120 = vector.shape_cast %119 : vector<1x8x120xf32> to vector<8x120xf32>
    %121 = vector.extract_strided_slice %18 {offsets = [23, 0, 0], sizes = [1, 8, 120], strides = [1, 1, 1]} : vector<24x8x120xf32> to vector<1x8x120xf32>
    %122 = vector.shape_cast %121 : vector<1x8x120xf32> to vector<8x120xf32>
    %123 = arith.maximumf %120, %122 : vector<8x120xf32>
    %124 = vector.broadcast %19 : vector<1x120xf32> to vector<8x120xf32>
    %125 = arith.addf %123, %124 : vector<8x120xf32>
    %cst_30 = arith.constant 0.000000e+00 : f32
    %126 = vector.broadcast %cst_30 : f32 to vector<8x120xf32>
    %127 = arith.maximumf %125, %126 : vector<8x120xf32>
    %128 = vector.shape_cast %28 : vector<8x120xf32> to vector<1x8x120xf32>
    %129 = vector.shape_cast %37 : vector<8x120xf32> to vector<1x8x120xf32>
    %130 = vector.shape_cast %46 : vector<8x120xf32> to vector<1x8x120xf32>
    %131 = vector.shape_cast %55 : vector<8x120xf32> to vector<1x8x120xf32>
    %132 = vector.shape_cast %64 : vector<8x120xf32> to vector<1x8x120xf32>
    %133 = vector.shape_cast %73 : vector<8x120xf32> to vector<1x8x120xf32>
    %134 = vector.shape_cast %82 : vector<8x120xf32> to vector<1x8x120xf32>
    %135 = vector.shape_cast %91 : vector<8x120xf32> to vector<1x8x120xf32>
    %136 = vector.shape_cast %100 : vector<8x120xf32> to vector<1x8x120xf32>
    %137 = vector.shape_cast %109 : vector<8x120xf32> to vector<1x8x120xf32>
    %138 = vector.shape_cast %118 : vector<8x120xf32> to vector<1x8x120xf32>
    %139 = vector.shape_cast %127 : vector<8x120xf32> to vector<1x8x120xf32>
    %140 = tpu.concatenate %128, %129, %130, %131, %132, %133, %134, %135, %136, %137, %138, %139 in 0 : vector<1x8x120xf32>, vector<1x8x120xf32>, vector<1x8x120xf32>, vector<1x8x120xf32>, vector<1x8x120xf32>, vector<1x8x120xf32>, vector<1x8x120xf32>, vector<1x8x120xf32>, vector<1x8x120xf32>, vector<1x8x120xf32>, vector<1x8x120xf32>, vector<1x8x120xf32> -> vector<12x8x120xf32>
    %141 = vector.extract_strided_slice %140 {offsets = [0, 0, 0], sizes = [8, 8, 120], strides = [1, 1, 1]} : vector<12x8x120xf32> to vector<8x8x120xf32>
    %142 = vector.shape_cast %141 : vector<8x8x120xf32> to vector<64x120xf32>
    %143 = vector.extract_strided_slice %140 {offsets = [1, 0, 0], sizes = [8, 8, 120], strides = [1, 1, 1]} : vector<12x8x120xf32> to vector<8x8x120xf32>
    %144 = vector.shape_cast %143 : vector<8x8x120xf32> to vector<64x120xf32>
    %145 = vector.extract_strided_slice %140 {offsets = [2, 0, 0], sizes = [8, 8, 120], strides = [1, 1, 1]} : vector<12x8x120xf32> to vector<8x8x120xf32>
    %146 = vector.shape_cast %145 : vector<8x8x120xf32> to vector<64x120xf32>
    %147 = vector.extract_strided_slice %140 {offsets = [3, 0, 0], sizes = [8, 8, 120], strides = [1, 1, 1]} : vector<12x8x120xf32> to vector<8x8x120xf32>
    %148 = vector.shape_cast %147 : vector<8x8x120xf32> to vector<64x120xf32>
    %149 = vector.extract_strided_slice %140 {offsets = [4, 0, 0], sizes = [8, 8, 120], strides = [1, 1, 1]} : vector<12x8x120xf32> to vector<8x8x120xf32>
    %150 = vector.shape_cast %149 : vector<8x8x120xf32> to vector<64x120xf32>
    %151 = tpu.concatenate %142, %144, %146, %148, %150 in 1 : vector<64x120xf32>, vector<64x120xf32>, vector<64x120xf32>, vector<64x120xf32>, vector<64x120xf32> -> vector<64x600xf32>
    %152 = arith.truncf %151 : vector<64x600xf32> to vector<64x600xbf16>
    %c0_31 = arith.constant 0 : index
    %c0_32 = arith.constant 0 : index
    %c0_33 = arith.constant 0 : index
    %153 = vector.load %arg4[%c0_31, %c0_32, %c0_33] : memref<2x600x80xbf16, #tpu.memory_space<vmem>>, vector<1x600x80xbf16>
    %154 = vector.shape_cast %153 : vector<1x600x80xbf16> to vector<600x80xbf16>
    %cst_34 = arith.constant dense<0.000000e+00> : vector<64x80xf32>
    %155 = tpu.matmul %152, %154, %cst_34 {dimension_numbers = #tpu.dot_dimension_numbers<[1], [0], [0], [1], [0, 0, 1, 1], [], []>} : vector<64x600xbf16>, vector<600x80xbf16>, vector<64x80xf32> -> vector<64x80xf32>
    %c1_35 = arith.constant 1 : index
    %c0_36 = arith.constant 0 : index
    %c0_37 = arith.constant 0 : index
    %156 = vector.load %arg4[%c1_35, %c0_36, %c0_37] : memref<2x600x80xbf16, #tpu.memory_space<vmem>>, vector<1x600x80xbf16>
    %157 = vector.shape_cast %156 : vector<1x600x80xbf16> to vector<600x80xbf16>
    %cst_38 = arith.constant dense<0.000000e+00> : vector<64x80xf32>
    %158 = tpu.matmul %152, %157, %cst_38 {dimension_numbers = #tpu.dot_dimension_numbers<[1], [0], [0], [1], [0, 0, 1, 1], [], []>} : vector<64x600xbf16>, vector<600x80xbf16>, vector<64x80xf32> -> vector<64x80xf32>
    %159 = arith.maximumf %155, %158 : vector<64x80xf32>
    %160 = vector.shape_cast %159 : vector<64x80xf32> to vector<8x8x80xf32>
    %c0_39 = arith.constant 0 : index
    %c0_40 = arith.constant 0 : index
    %161 = vector.load %arg5[%c0_39, %c0_40] : memref<1x80xf32, #tpu.memory_space<vmem>>, vector<1x80xf32>
    %162 = vector.extract_strided_slice %160 {offsets = [0, 0, 0], sizes = [1, 8, 80], strides = [1, 1, 1]} : vector<8x8x80xf32> to vector<1x8x80xf32>
    %163 = vector.shape_cast %162 : vector<1x8x80xf32> to vector<8x80xf32>
    %164 = vector.extract_strided_slice %160 {offsets = [1, 0, 0], sizes = [1, 8, 80], strides = [1, 1, 1]} : vector<8x8x80xf32> to vector<1x8x80xf32>
    %165 = vector.shape_cast %164 : vector<1x8x80xf32> to vector<8x80xf32>
    %166 = arith.maximumf %163, %165 : vector<8x80xf32>
    %167 = vector.broadcast %161 : vector<1x80xf32> to vector<8x80xf32>
    %168 = arith.addf %166, %167 : vector<8x80xf32>
    %cst_41 = arith.constant 0.000000e+00 : f32
    %169 = vector.broadcast %cst_41 : f32 to vector<8x80xf32>
    %170 = arith.maximumf %168, %169 : vector<8x80xf32>
    %171 = vector.extract_strided_slice %160 {offsets = [2, 0, 0], sizes = [1, 8, 80], strides = [1, 1, 1]} : vector<8x8x80xf32> to vector<1x8x80xf32>
    %172 = vector.shape_cast %171 : vector<1x8x80xf32> to vector<8x80xf32>
    %173 = vector.extract_strided_slice %160 {offsets = [3, 0, 0], sizes = [1, 8, 80], strides = [1, 1, 1]} : vector<8x8x80xf32> to vector<1x8x80xf32>
    %174 = vector.shape_cast %173 : vector<1x8x80xf32> to vector<8x80xf32>
    %175 = arith.maximumf %172, %174 : vector<8x80xf32>
    %176 = vector.broadcast %161 : vector<1x80xf32> to vector<8x80xf32>
    %177 = arith.addf %175, %176 : vector<8x80xf32>
    %cst_42 = arith.constant 0.000000e+00 : f32
    %178 = vector.broadcast %cst_42 : f32 to vector<8x80xf32>
    %179 = arith.maximumf %177, %178 : vector<8x80xf32>
    %180 = vector.extract_strided_slice %160 {offsets = [4, 0, 0], sizes = [1, 8, 80], strides = [1, 1, 1]} : vector<8x8x80xf32> to vector<1x8x80xf32>
    %181 = vector.shape_cast %180 : vector<1x8x80xf32> to vector<8x80xf32>
    %182 = vector.extract_strided_slice %160 {offsets = [5, 0, 0], sizes = [1, 8, 80], strides = [1, 1, 1]} : vector<8x8x80xf32> to vector<1x8x80xf32>
    %183 = vector.shape_cast %182 : vector<1x8x80xf32> to vector<8x80xf32>
    %184 = arith.maximumf %181, %183 : vector<8x80xf32>
    %185 = vector.broadcast %161 : vector<1x80xf32> to vector<8x80xf32>
    %186 = arith.addf %184, %185 : vector<8x80xf32>
    %cst_43 = arith.constant 0.000000e+00 : f32
    %187 = vector.broadcast %cst_43 : f32 to vector<8x80xf32>
    %188 = arith.maximumf %186, %187 : vector<8x80xf32>
    %189 = vector.extract_strided_slice %160 {offsets = [6, 0, 0], sizes = [1, 8, 80], strides = [1, 1, 1]} : vector<8x8x80xf32> to vector<1x8x80xf32>
    %190 = vector.shape_cast %189 : vector<1x8x80xf32> to vector<8x80xf32>
    %191 = vector.extract_strided_slice %160 {offsets = [7, 0, 0], sizes = [1, 8, 80], strides = [1, 1, 1]} : vector<8x8x80xf32> to vector<1x8x80xf32>
    %192 = vector.shape_cast %191 : vector<1x8x80xf32> to vector<8x80xf32>
    %193 = arith.maximumf %190, %192 : vector<8x80xf32>
    %194 = vector.broadcast %161 : vector<1x80xf32> to vector<8x80xf32>
    %195 = arith.addf %193, %194 : vector<8x80xf32>
    %cst_44 = arith.constant 0.000000e+00 : f32
    %196 = vector.broadcast %cst_44 : f32 to vector<8x80xf32>
    %197 = arith.maximumf %195, %196 : vector<8x80xf32>
    %198 = tpu.concatenate %170, %179, %188, %197 in 1 : vector<8x80xf32>, vector<8x80xf32>, vector<8x80xf32>, vector<8x80xf32> -> vector<8x320xf32>
    %199 = arith.truncf %198 : vector<8x320xf32> to vector<8x320xbf16>
    %c0_45 = arith.constant 0 : index
    %c0_46 = arith.constant 0 : index
    %200 = vector.load %arg6[%c0_45, %c0_46] : memref<320x50xbf16, #tpu.memory_space<vmem>>, vector<320x50xbf16>
    %cst_47 = arith.constant dense<0.000000e+00> : vector<8x50xf32>
    %201 = tpu.matmul %199, %200, %cst_47 {dimension_numbers = #tpu.dot_dimension_numbers<[1], [0], [0], [1], [0, 0, 1, 1], [], []>} : vector<8x320xbf16>, vector<320x50xbf16>, vector<8x50xf32> -> vector<8x50xf32>
    %c0_48 = arith.constant 0 : index
    %c0_49 = arith.constant 0 : index
    %202 = vector.load %arg7[%c0_48, %c0_49] : memref<1x50xf32, #tpu.memory_space<vmem>>, vector<1x50xf32>
    %203 = vector.broadcast %202 : vector<1x50xf32> to vector<8x50xf32>
    %204 = arith.addf %201, %203 : vector<8x50xf32>
    %cst_50 = arith.constant 0.000000e+00 : f32
    %205 = vector.broadcast %cst_50 : f32 to vector<8x50xf32>
    %206 = arith.maximumf %204, %205 : vector<8x50xf32>
    %207 = arith.truncf %206 : vector<8x50xf32> to vector<8x50xbf16>
    %c0_51 = arith.constant 0 : index
    %c0_52 = arith.constant 0 : index
    %208 = vector.load %arg8[%c0_51, %c0_52] : memref<50x10xbf16, #tpu.memory_space<vmem>>, vector<50x10xbf16>
    %cst_53 = arith.constant dense<0.000000e+00> : vector<8x10xf32>
    %209 = tpu.matmul %207, %208, %cst_53 {dimension_numbers = #tpu.dot_dimension_numbers<[1], [0], [0], [1], [0, 0, 1, 1], [], []>} : vector<8x50xbf16>, vector<50x10xbf16>, vector<8x10xf32> -> vector<8x10xf32>
    %c0_54 = arith.constant 0 : index
    %c0_55 = arith.constant 0 : index
    %210 = vector.load %arg9[%c0_54, %c0_55] : memref<1x10xf32, #tpu.memory_space<vmem>>, vector<1x10xf32>
    %211 = vector.broadcast %210 : vector<1x10xf32> to vector<8x10xf32>
    %212 = arith.addf %209, %211 : vector<8x10xf32>
    %cst_56 = arith.constant dense<0xFF800000> : vector<8xf32>
    %213 = vector.multi_reduction <maximumf>, %212, %cst_56 [1] : vector<8x10xf32> to vector<8xf32>
    %214 = vector.shape_cast %213 : vector<8xf32> to vector<8x1xf32>
    %215 = vector.broadcast %214 : vector<8x1xf32> to vector<8x10xf32>
    %216 = arith.subf %212, %215 : vector<8x10xf32>
    %217 = math.exp %216 : vector<8x10xf32>
    %cst_57 = arith.constant dense<0.000000e+00> : vector<8xf32>
    %218 = vector.multi_reduction <add>, %217, %cst_57 [1] : vector<8x10xf32> to vector<8xf32>
    %219 = vector.shape_cast %218 : vector<8xf32> to vector<8x1xf32>
    %220 = math.log %219 : vector<8x1xf32>
    %221 = arith.addf %220, %214 : vector<8x1xf32>
    %222 = vector.broadcast %221 : vector<8x1xf32> to vector<8x10xf32>
    %223 = arith.subf %212, %222 : vector<8x10xf32>
    %c0_58 = arith.constant 0 : index
    %c0_59 = arith.constant 0 : index
    %224 = vector.load %arg10[%c0_58, %c0_59] : memref<8x10xf32, #tpu.memory_space<vmem>>, vector<8x10xf32>
    tpu.vector_store %arg10[%c0_58, %c0_59], %223 {strides = array<i32>} : memref<8x10xf32, #tpu.memory_space<vmem>>, vector<8x10xf32>,
    return
  }
  func.func @transform_0(%arg0: i32) -> (i32, i32, i32) {
    %c0_i32 = arith.constant 0 : i32
    %c0_i32_0 = arith.constant 0 : i32
    %c0_i32_1 = arith.constant 0 : i32
    return %c0_i32, %arg0, %c0_i32_0 : i32, i32, i32
  }
  func.func @transform_1(%arg0: i32) -> (i32, i32, i32) {
    %c0_i32 = arith.constant 0 : i32
    %c0_i32_0 = arith.constant 0 : i32
    %c0_i32_1 = arith.constant 0 : i32
    %c0_i32_2 = arith.constant 0 : i32
    return %c0_i32, %c0_i32_0, %c0_i32_1 : i32, i32, i32
  }
  func.func @transform_2(%arg0: i32) -> (i32, i32) {
    %c0_i32 = arith.constant 0 : i32
    %c0_i32_0 = arith.constant 0 : i32
    %c0_i32_1 = arith.constant 0 : i32
    return %c0_i32, %c0_i32_0 : i32, i32
  }
  func.func @transform_3(%arg0: i32) -> (i32, i32, i32) {
    %c0_i32 = arith.constant 0 : i32
    %c0_i32_0 = arith.constant 0 : i32
    %c0_i32_1 = arith.constant 0 : i32
    %c0_i32_2 = arith.constant 0 : i32
    return %c0_i32, %c0_i32_0, %c0_i32_1 : i32, i32, i32
  }
  func.func @transform_4(%arg0: i32) -> (i32, i32) {
    %c0_i32 = arith.constant 0 : i32
    %c0_i32_0 = arith.constant 0 : i32
    %c0_i32_1 = arith.constant 0 : i32
    return %c0_i32, %c0_i32_0 : i32, i32
  }
  func.func @transform_5(%arg0: i32) -> (i32, i32) {
    %c0_i32 = arith.constant 0 : i32
    %c0_i32_0 = arith.constant 0 : i32
    %c0_i32_1 = arith.constant 0 : i32
    return %c0_i32, %c0_i32_0 : i32, i32
  }
  func.func @transform_6(%arg0: i32) -> (i32, i32) {
    %c0_i32 = arith.constant 0 : i32
    %c0_i32_0 = arith.constant 0 : i32
    %c0_i32_1 = arith.constant 0 : i32
    return %c0_i32, %c0_i32_0 : i32, i32
  }
  func.func @transform_7(%arg0: i32) -> (i32, i32) {
    %c0_i32 = arith.constant 0 : i32
    %c0_i32_0 = arith.constant 0 : i32
    %c0_i32_1 = arith.constant 0 : i32
    return %c0_i32, %c0_i32_0 : i32, i32
  }
  func.func @transform_8(%arg0: i32) -> (i32, i32) {
    %c0_i32 = arith.constant 0 : i32
    %c0_i32_0 = arith.constant 0 : i32
    %c0_i32_1 = arith.constant 0 : i32
    return %c0_i32, %c0_i32_0 : i32, i32
  }
  func.func @transform_9(%arg0: i32) -> (i32, i32) {
    %c0_i32 = arith.constant 0 : i32
    %c0_i32_0 = arith.constant 0 : i32
    return %arg0, %c0_i32 : i32, i32
  }
}

</mosaic_0001>

<llo_original>
// kernel: neural_network_forward.1
$region0: #{neural_network_forward.1}
  #allocation0 [shape = 'u32[]', space=smem, size = 0x4, offset = 0x4, fixed_abs, tag = 'smem constant byte address 0x4 - core index']
  #allocation1 [shape = 'u32[72,128]{1,0:T(1,128)}', space=vmem, size = 0x9000, scoped, tag = 'internal scratch']
  %s0 = inlined_call_operand.vmem [shape: bf16[28,8,28], index: 0, kind: input, shape index: {}]
  %s1 = inlined_call_operand.vmem [shape: bf16[2,140,120], index: 1, kind: input, shape index: {}]
  %s2 = inlined_call_operand.vmem [shape: f32[1,120], index: 2, kind: input, shape index: {}]
  %s3 = inlined_call_operand.vmem [shape: bf16[2,600,80], index: 3, kind: input, shape index: {}]
  %s4 = inlined_call_operand.vmem [shape: f32[1,80], index: 4, kind: input, shape index: {}]
  %s5 = inlined_call_operand.vmem [shape: bf16[320,50], index: 5, kind: input, shape index: {}]
  %s6 = inlined_call_operand.vmem [shape: f32[1,50], index: 6, kind: input, shape index: {}]
  %s7 = inlined_call_operand.vmem [shape: bf16[50,10], index: 7, kind: input, shape index: {}]
  %s8 = inlined_call_operand.vmem [shape: f32[1,10], index: 8, kind: input, shape index: {}]
  %s9 = inlined_call_operand.vmem [shape: f32[8,10], index: 9, kind: output, shape index: {}]
  %s10 = sld [smem:[#allocation0]]
  $region46: #{neural_network_forward.1} parent=0
    _
  %s12 = ssub.s32 1, %s10
  %s13 = scalar_select 0, %s12, %s10
  // Predicated region
  $region2: #{neural_network_forward.1} parent=0 // pred_check
    _
  $region3: #{neural_network_forward.1} parent=0 // pred_check_branch
    %15 = sbr.rel (0) target = $region5
  $region4: #{neural_network_forward.1} parent=0 // pred_region
    _
  $region5: #{neural_network_forward.1} parent=0 // pred_fallthru
    _
  // Predicated region
  $region6: #{neural_network_forward.1} parent=0 // pred_check
    _
  $region7: #{neural_network_forward.1} parent=0 // pred_check_branch
    %17 = sbr.rel (0) target = $region9
  $region8: #{neural_network_forward.1} parent=0 // pred_region
    _
  $region9: #{neural_network_forward.1} parent=0 // pred_fallthru
    _
  // Predicated region
  $region10: #{neural_network_forward.1} parent=0 // pred_check
    _
  $region11: #{neural_network_forward.1} parent=0 // pred_check_branch
    %19 = sbr.rel (0) target = $region13
  $region12: #{neural_network_forward.1} parent=0 // pred_region
    _
  $region13: #{neural_network_forward.1} parent=0 // pred_fallthru
    _
  // Predicated region
  $region14: #{neural_network_forward.1} parent=0 // pred_check
    _
  $region15: #{neural_network_forward.1} parent=0 // pred_check_branch
    %21 = sbr.rel (0) target = $region17
  $region16: #{neural_network_forward.1} parent=0 // pred_region
    _
  $region17: #{neural_network_forward.1} parent=0 // pred_fallthru
    _
  // Predicated region
  $region18: #{neural_network_forward.1} parent=0 // pred_check
    _
  $region19: #{neural_network_forward.1} parent=0 // pred_check_branch
    %23 = sbr.rel (0) target = $region21
  $region20: #{neural_network_forward.1} parent=0 // pred_region
    _
  $region21: #{neural_network_forward.1} parent=0 // pred_fallthru
    _
  // Predicated region
  $region22: #{neural_network_forward.1} parent=0 // pred_check
    _
  $region23: #{neural_network_forward.1} parent=0 // pred_check_branch
    %25 = sbr.rel (0) target = $region25
  $region24: #{neural_network_forward.1} parent=0 // pred_region
    _
  $region25: #{neural_network_forward.1} parent=0 // pred_fallthru
    _
  // Predicated region
  $region26: #{neural_network_forward.1} parent=0 // pred_check
    _
  $region27: #{neural_network_forward.1} parent=0 // pred_check_branch
    %27 = sbr.rel (0) target = $region29
  $region28: #{neural_network_forward.1} parent=0 // pred_region
    _
  $region29: #{neural_network_forward.1} parent=0 // pred_fallthru
    _
  // Predicated region
  $region30: #{neural_network_forward.1} parent=0 // pred_check
    _
  $region31: #{neural_network_forward.1} parent=0 // pred_check_branch
    %29 = sbr.rel (0) target = $region33
  $region32: #{neural_network_forward.1} parent=0 // pred_region
    _
  $region33: #{neural_network_forward.1} parent=0 // pred_fallthru
    _
  // Predicated region
  $region34: #{neural_network_forward.1} parent=0 // pred_check
    _
  $region35: #{neural_network_forward.1} parent=0 // pred_check_branch
    %31 = sbr.rel (0) target = $region37
  $region36: #{neural_network_forward.1} parent=0 // pred_region
    _
  $region37: #{neural_network_forward.1} parent=0 // pred_fallthru
    _
  %v33 = vld [vmem:[%s0] sm:$0xf]
  %v34 = vld [vmem:[%s0 + $0x4] sm:$0xf]
  %v35 = vld [vmem:[%s0 + $0x8] sm:$0xf]
  %v36 = vld [vmem:[%s0 + $0xc] sm:$0xf]
  %v37 = vld [vmem:[%s0 + $0x10] sm:$0xf]
  %v38 = vld [vmem:[%s0 + $0x14] sm:$0xf]
  %v39 = vld [vmem:[%s0 + $0x18] sm:$0xf]
  %v40 = vld [vmem:[%s0 + $0x1c] sm:$0xf]
  %v41 = vld [vmem:[%s0 + $0x20] sm:$0xf]
  %v42 = vld [vmem:[%s0 + $0x24] sm:$0xf]
  %v43 = vld [vmem:[%s0 + $0x28] sm:$0xf]
  %v44 = vld [vmem:[%s0 + $0x2c] sm:$0xf]
  %v45 = vld [vmem:[%s0 + $0x30] sm:$0xf]
  %v46 = vld [vmem:[%s0 + $0x34] sm:$0xf]
  %v47 = vld [vmem:[%s0 + $0x38] sm:$0xf]
  %v48 = vld [vmem:[%s0 + $0x3c] sm:$0xf]
  %v49 = vld [vmem:[%s0 + $0x40] sm:$0xf]
  %v50 = vld [vmem:[%s0 + $0x44] sm:$0xf]
  %v51 = vld [vmem:[%s0 + $0x48] sm:$0xf]
  %v52 = vld [vmem:[%s0 + $0x4c] sm:$0xf]
  %v53 = vld [vmem:[%s0 + $0x50] sm:$0xf]
  %v54 = vld [vmem:[%s0 + $0x54] sm:$0xf]
  %v55 = vld [vmem:[%s0 + $0x58] sm:$0xf]
  %v56 = vld [vmem:[%s0 + $0x5c] sm:$0xf]
  %s57 = scalar_lea.vmem %s0, 4
  %v58 = vld [vmem:[%s57] sm:$0xf]
  %v59 = vld [vmem:[%s57 + $0x4] sm:$0xf]
  %v60 = vld [vmem:[%s57 + $0x8] sm:$0xf]
  %v61 = vld [vmem:[%s57 + $0xc] sm:$0xf]
  %v62 = vld [vmem:[%s57 + $0x10] sm:$0xf]
  %v63 = vld [vmem:[%s57 + $0x14] sm:$0xf]
  %v64 = vld [vmem:[%s57 + $0x18] sm:$0xf]
  %v65 = vld [vmem:[%s57 + $0x1c] sm:$0xf]
  %v66 = vld [vmem:[%s57 + $0x20] sm:$0xf]
  %v67 = vld [vmem:[%s57 + $0x24] sm:$0xf]
  %v68 = vld [vmem:[%s57 + $0x28] sm:$0xf]
  %v69 = vld [vmem:[%s57 + $0x2c] sm:$0xf]
  %v70 = vld [vmem:[%s57 + $0x30] sm:$0xf]
  %v71 = vld [vmem:[%s57 + $0x34] sm:$0xf]
  %v72 = vld [vmem:[%s57 + $0x38] sm:$0xf]
  %v73 = vld [vmem:[%s57 + $0x3c] sm:$0xf]
  %v74 = vld [vmem:[%s57 + $0x40] sm:$0xf]
  %v75 = vld [vmem:[%s57 + $0x44] sm:$0xf]
  %v76 = vld [vmem:[%s57 + $0x48] sm:$0xf]
  %v77 = vld [vmem:[%s57 + $0x4c] sm:$0xf]
  %v78 = vld [vmem:[%s57 + $0x50] sm:$0xf]
  %v79 = vld [vmem:[%s57 + $0x54] sm:$0xf]
  %v80 = vld [vmem:[%s57 + $0x58] sm:$0xf]
  %v81 = vld [vmem:[%s57 + $0x5c] sm:$0xf]
  %s82 = scalar_lea.vmem %s0, 8
  %v83 = vld [vmem:[%s82] sm:$0xf]
  %v84 = vld [vmem:[%s82 + $0x4] sm:$0xf]
  %v85 = vld [vmem:[%s82 + $0x8] sm:$0xf]
  %v86 = vld [vmem:[%s82 + $0xc] sm:$0xf]
  %v87 = vld [vmem:[%s82 + $0x10] sm:$0xf]
  %v88 = vld [vmem:[%s82 + $0x14] sm:$0xf]
  %v89 = vld [vmem:[%s82 + $0x18] sm:$0xf]
  %v90 = vld [vmem:[%s82 + $0x1c] sm:$0xf]
  %v91 = vld [vmem:[%s82 + $0x20] sm:$0xf]
  %v92 = vld [vmem:[%s82 + $0x24] sm:$0xf]
  %v93 = vld [vmem:[%s82 + $0x28] sm:$0xf]
  %v94 = vld [vmem:[%s82 + $0x2c] sm:$0xf]
  %v95 = vld [vmem:[%s82 + $0x30] sm:$0xf]
  %v96 = vld [vmem:[%s82 + $0x34] sm:$0xf]
  %v97 = vld [vmem:[%s82 + $0x38] sm:$0xf]
  %v98 = vld [vmem:[%s82 + $0x3c] sm:$0xf]
  %v99 = vld [vmem:[%s82 + $0x40] sm:$0xf]
  %v100 = vld [vmem:[%s82 + $0x44] sm:$0xf]
  %v101 = vld [vmem:[%s82 + $0x48] sm:$0xf]
  %v102 = vld [vmem:[%s82 + $0x4c] sm:$0xf]
  %v103 = vld [vmem:[%s82 + $0x50] sm:$0xf]
  %v104 = vld [vmem:[%s82 + $0x54] sm:$0xf]
  %v105 = vld [vmem:[%s82 + $0x58] sm:$0xf]
  %v106 = vld [vmem:[%s82 + $0x5c] sm:$0xf]
  %s107 = scalar_lea.vmem %s0, 12
  %v108 = vld [vmem:[%s107] sm:$0xf]
  %v109 = vld [vmem:[%s107 + $0x4] sm:$0xf]
  %v110 = vld [vmem:[%s107 + $0x8] sm:$0xf]
  %v111 = vld [vmem:[%s107 + $0xc] sm:$0xf]
  %v112 = vld [vmem:[%s107 + $0x10] sm:$0xf]
  %v113 = vld [vmem:[%s107 + $0x14] sm:$0xf]
  %v114 = vld [vmem:[%s107 + $0x18] sm:$0xf]
  %v115 = vld [vmem:[%s107 + $0x1c] sm:$0xf]
  %v116 = vld [vmem:[%s107 + $0x20] sm:$0xf]
  %v117 = vld [vmem:[%s107 + $0x24] sm:$0xf]
  %v118 = vld [vmem:[%s107 + $0x28] sm:$0xf]
  %v119 = vld [vmem:[%s107 + $0x2c] sm:$0xf]
  %v120 = vld [vmem:[%s107 + $0x30] sm:$0xf]
  %v121 = vld [vmem:[%s107 + $0x34] sm:$0xf]
  %v122 = vld [vmem:[%s107 + $0x38] sm:$0xf]
  %v123 = vld [vmem:[%s107 + $0x3c] sm:$0xf]
  %v124 = vld [vmem:[%s107 + $0x40] sm:$0xf]
  %v125 = vld [vmem:[%s107 + $0x44] sm:$0xf]
  %v126 = vld [vmem:[%s107 + $0x48] sm:$0xf]
  %v127 = vld [vmem:[%s107 + $0x4c] sm:$0xf]
  %v128 = vld [vmem:[%s107 + $0x50] sm:$0xf]
  %v129 = vld [vmem:[%s107 + $0x54] sm:$0xf]
  %v130 = vld [vmem:[%s107 + $0x58] sm:$0xf]
  %v131 = vld [vmem:[%s107 + $0x5c] sm:$0xf]
  %s132 = scalar_lea.vmem %s0, 16
  %v133 = vld [vmem:[%s132] sm:$0xf]
  %v134 = vld [vmem:[%s132 + $0x4] sm:$0xf]
  %v135 = vld [vmem:[%s132 + $0x8] sm:$0xf]
  %v136 = vld [vmem:[%s132 + $0xc] sm:$0xf]
  %v137 = vld [vmem:[%s132 + $0x10] sm:$0xf]
  %v138 = vld [vmem:[%s132 + $0x14] sm:$0xf]
  %v139 = vld [vmem:[%s132 + $0x18] sm:$0xf]
  %v140 = vld [vmem:[%s132 + $0x1c] sm:$0xf]
  %v141 = vld [vmem:[%s132 + $0x20] sm:$0xf]
  %v142 = vld [vmem:[%s132 + $0x24] sm:$0xf]
  %v143 = vld [vmem:[%s132 + $0x28] sm:$0xf]
  %v144 = vld [vmem:[%s132 + $0x2c] sm:$0xf]
  %v145 = vld [vmem:[%s132 + $0x30] sm:$0xf]
  %v146 = vld [vmem:[%s132 + $0x34] sm:$0xf]
  %v147 = vld [vmem:[%s132 + $0x38] sm:$0xf]
  %v148 = vld [vmem:[%s132 + $0x3c] sm:$0xf]
  %v149 = vld [vmem:[%s132 + $0x40] sm:$0xf]
  %v150 = vld [vmem:[%s132 + $0x44] sm:$0xf]
  %v151 = vld [vmem:[%s132 + $0x48] sm:$0xf]
  %v152 = vld [vmem:[%s132 + $0x4c] sm:$0xf]
  %v153 = vld [vmem:[%s132 + $0x50] sm:$0xf]
  %v154 = vld [vmem:[%s132 + $0x54] sm:$0xf]
  %v155 = vld [vmem:[%s132 + $0x58] sm:$0xf]
  %v156 = vld [vmem:[%s132 + $0x5c] sm:$0xf]
  %v181 = vunpack.c.l.b16 %v33
  %v182 = vunpack.c.l.b16 %v34
  %v183 = vunpack.c.l.b16 %v35
  %v184 = vunpack.c.l.b16 %v36
  %v185 = vunpack.c.l.b16 %v37
  %v186 = vunpack.c.l.b16 %v38
  %v187 = vunpack.c.l.b16 %v39
  %v188 = vunpack.c.l.b16 %v40
  %v189 = vunpack.c.l.b16 %v41
  %v190 = vunpack.c.l.b16 %v42
  %v191 = vunpack.c.l.b16 %v43
  %v192 = vunpack.c.l.b16 %v44
  %v193 = vunpack.c.l.b16 %v45
  %v194 = vunpack.c.l.b16 %v46
  %v195 = vunpack.c.l.b16 %v47
  %v196 = vunpack.c.l.b16 %v48
  %v197 = vunpack.c.l.b16 %v49
  %v198 = vunpack.c.l.b16 %v50
  %v199 = vunpack.c.l.b16 %v51
  %v200 = vunpack.c.l.b16 %v52
  %v201 = vunpack.c.l.b16 %v53
  %v202 = vunpack.c.l.b16 %v54
  %v203 = vunpack.c.l.b16 %v55
  %v204 = vunpack.c.l.b16 %v56
  %v205 = vpack.c.b16 %v182, %v181
  %v206 = vpack.c.b16 %v184, %v183
  %v207 = vpack.c.b16 %v186, %v185
  %v208 = vpack.c.b16 %v188, %v187
  %v209 = vpack.c.b16 %v190, %v189
  %v210 = vpack.c.b16 %v192, %v191
  %v211 = vpack.c.b16 %v194, %v193
  %v212 = vpack.c.b16 %v196, %v195
  %v213 = vpack.c.b16 %v198, %v197
  %v214 = vpack.c.b16 %v200, %v199
  %v215 = vpack.c.b16 %v202, %v201
  %v216 = vpack.c.b16 %v204, %v203
  %v241 = vunpack.c.l.b16 %v58
  %v242 = vunpack.c.l.b16 %v59
  %v243 = vunpack.c.l.b16 %v60
  %v244 = vunpack.c.l.b16 %v61
  %v245 = vunpack.c.l.b16 %v62
  %v246 = vunpack.c.l.b16 %v63
  %v247 = vunpack.c.l.b16 %v64
  %v248 = vunpack.c.l.b16 %v65
  %v249 = vunpack.c.l.b16 %v66
  %v250 = vunpack.c.l.b16 %v67
  %v251 = vunpack.c.l.b16 %v68
  %v252 = vunpack.c.l.b16 %v69
  %v253 = vunpack.c.l.b16 %v70
  %v254 = vunpack.c.l.b16 %v71
  %v255 = vunpack.c.l.b16 %v72
  %v256 = vunpack.c.l.b16 %v73
  %v257 = vunpack.c.l.b16 %v74
  %v258 = vunpack.c.l.b16 %v75
  %v259 = vunpack.c.l.b16 %v76
  %v260 = vunpack.c.l.b16 %v77
  %v261 = vunpack.c.l.b16 %v78
  %v262 = vunpack.c.l.b16 %v79
  %v263 = vunpack.c.l.b16 %v80
  %v264 = vunpack.c.l.b16 %v81
  %v265 = vpack.c.b16 %v242, %v241
  %v266 = vpack.c.b16 %v244, %v243
  %v267 = vpack.c.b16 %v246, %v245
  %v268 = vpack.c.b16 %v248, %v247
  %v269 = vpack.c.b16 %v250, %v249
  %v270 = vpack.c.b16 %v252, %v251
  %v271 = vpack.c.b16 %v254, %v253
  %v272 = vpack.c.b16 %v256, %v255
  %v273 = vpack.c.b16 %v258, %v257
  %v274 = vpack.c.b16 %v260, %v259
  %v275 = vpack.c.b16 %v262, %v261
  %v276 = vpack.c.b16 %v264, %v263
  %277 = vrot.lane.b32.xlu0 %v265, 28
  %v278 = vpop.permute.xlu0 %277
  %279 = vrot.lane.b32.xlu0 %v266, 28
  %v280 = vpop.permute.xlu0 %279
  %281 = vrot.lane.b32.xlu0 %v267, 28
  %v282 = vpop.permute.xlu0 %281
  %283 = vrot.lane.b32.xlu0 %v268, 28
  %v284 = vpop.permute.xlu0 %283
  %285 = vrot.lane.b32.xlu0 %v269, 28
  %v286 = vpop.permute.xlu0 %285
  %287 = vrot.lane.b32.xlu0 %v270, 28
  %v288 = vpop.permute.xlu0 %287
  %289 = vrot.lane.b32.xlu0 %v271, 28
  %v290 = vpop.permute.xlu0 %289
  %291 = vrot.lane.b32.xlu0 %v272, 28
  %v292 = vpop.permute.xlu0 %291
  %293 = vrot.lane.b32.xlu0 %v273, 28
  %v294 = vpop.permute.xlu0 %293
  %295 = vrot.lane.b32.xlu0 %v274, 28
  %v296 = vpop.permute.xlu0 %295
  %297 = vrot.lane.b32.xlu0 %v275, 28
  %v298 = vpop.permute.xlu0 %297
  %299 = vrot.lane.b32.xlu0 %v276, 28
  %v300 = vpop.permute.xlu0 %299
  %v325 = vunpack.c.l.b16 %v83
  %v326 = vunpack.c.l.b16 %v84
  %v327 = vunpack.c.l.b16 %v85
  %v328 = vunpack.c.l.b16 %v86
  %v329 = vunpack.c.l.b16 %v87
  %v330 = vunpack.c.l.b16 %v88
  %v331 = vunpack.c.l.b16 %v89
  %v332 = vunpack.c.l.b16 %v90
  %v333 = vunpack.c.l.b16 %v91
  %v334 = vunpack.c.l.b16 %v92
  %v335 = vunpack.c.l.b16 %v93
  %v336 = vunpack.c.l.b16 %v94
  %v337 = vunpack.c.l.b16 %v95
  %v338 = vunpack.c.l.b16 %v96
  %v339 = vunpack.c.l.b16 %v97
  %v340 = vunpack.c.l.b16 %v98
  %v341 = vunpack.c.l.b16 %v99
  %v342 = vunpack.c.l.b16 %v100
  %v343 = vunpack.c.l.b16 %v101
  %v344 = vunpack.c.l.b16 %v102
  %v345 = vunpack.c.l.b16 %v103
  %v346 = vunpack.c.l.b16 %v104
  %v347 = vunpack.c.l.b16 %v105
  %v348 = vunpack.c.l.b16 %v106
  %v349 = vpack.c.b16 %v326, %v325
  %v350 = vpack.c.b16 %v328, %v327
  %v351 = vpack.c.b16 %v330, %v329
  %v352 = vpack.c.b16 %v332, %v331
  %v353 = vpack.c.b16 %v334, %v333
  %v354 = vpack.c.b16 %v336, %v335
  %v355 = vpack.c.b16 %v338, %v337
  %v356 = vpack.c.b16 %v340, %v339
  %v357 = vpack.c.b16 %v342, %v341
  %v358 = vpack.c.b16 %v344, %v343
  %v359 = vpack.c.b16 %v346, %v345
  %v360 = vpack.c.b16 %v348, %v347
  %361 = vrot.lane.b32.xlu0 %v349, 56
  %v362 = vpop.permute.xlu0 %361
  %363 = vrot.lane.b32.xlu0 %v350, 56
  %v364 = vpop.permute.xlu0 %363
  %365 = vrot.lane.b32.xlu0 %v351, 56
  %v366 = vpop.permute.xlu0 %365
  %367 = vrot.lane.b32.xlu0 %v352, 56
  %v368 = vpop.permute.xlu0 %367
  %369 = vrot.lane.b32.xlu0 %v353, 56
  %v370 = vpop.permute.xlu0 %369
  %371 = vrot.lane.b32.xlu0 %v354, 56
  %v372 = vpop.permute.xlu0 %371
  %373 = vrot.lane.b32.xlu0 %v355, 56
  %v374 = vpop.permute.xlu0 %373
  %375 = vrot.lane.b32.xlu0 %v356, 56
  %v376 = vpop.permute.xlu0 %375
  %377 = vrot.lane.b32.xlu0 %v357, 56
  %v378 = vpop.permute.xlu0 %377
  %379 = vrot.lane.b32.xlu0 %v358, 56
  %v380 = vpop.permute.xlu0 %379
  %381 = vrot.lane.b32.xlu0 %v359, 56
  %v382 = vpop.permute.xlu0 %381
  %383 = vrot.lane.b32.xlu0 %v360, 56
  %v384 = vpop.permute.xlu0 %383
  %v409 = vunpack.c.l.b16 %v108
  %v410 = vunpack.c.l.b16 %v109
  %v411 = vunpack.c.l.b16 %v110
  %v412 = vunpack.c.l.b16 %v111
  %v413 = vunpack.c.l.b16 %v112
  %v414 = vunpack.c.l.b16 %v113
  %v415 = vunpack.c.l.b16 %v114
  %v416 = vunpack.c.l.b16 %v115
  %v417 = vunpack.c.l.b16 %v116
  %v418 = vunpack.c.l.b16 %v117
  %v419 = vunpack.c.l.b16 %v118
  %v420 = vunpack.c.l.b16 %v119
  %v421 = vunpack.c.l.b16 %v120
  %v422 = vunpack.c.l.b16 %v121
  %v423 = vunpack.c.l.b16 %v122
  %v424 = vunpack.c.l.b16 %v123
  %v425 = vunpack.c.l.b16 %v124
  %v426 = vunpack.c.l.b16 %v125
  %v427 = vunpack.c.l.b16 %v126
  %v428 = vunpack.c.l.b16 %v127
  %v429 = vunpack.c.l.b16 %v128
  %v430 = vunpack.c.l.b16 %v129
  %v431 = vunpack.c.l.b16 %v130
  %v432 = vunpack.c.l.b16 %v131
  %v433 = vpack.c.b16 %v410, %v409
  %v434 = vpack.c.b16 %v412, %v411
  %v435 = vpack.c.b16 %v414, %v413
  %v436 = vpack.c.b16 %v416, %v415
  %v437 = vpack.c.b16 %v418, %v417
  %v438 = vpack.c.b16 %v420, %v419
  %v439 = vpack.c.b16 %v422, %v421
  %v440 = vpack.c.b16 %v424, %v423
  %v441 = vpack.c.b16 %v426, %v425
  %v442 = vpack.c.b16 %v428, %v427
  %v443 = vpack.c.b16 %v430, %v429
  %v444 = vpack.c.b16 %v432, %v431
  %445 = vrot.lane.b32.xlu0 %v433, 84
  %v446 = vpop.permute.xlu0 %445
  %447 = vrot.lane.b32.xlu0 %v434, 84
  %v448 = vpop.permute.xlu0 %447
  %449 = vrot.lane.b32.xlu0 %v435, 84
  %v450 = vpop.permute.xlu0 %449
  %451 = vrot.lane.b32.xlu0 %v436, 84
  %v452 = vpop.permute.xlu0 %451
  %453 = vrot.lane.b32.xlu0 %v437, 84
  %v454 = vpop.permute.xlu0 %453
  %455 = vrot.lane.b32.xlu0 %v438, 84
  %v456 = vpop.permute.xlu0 %455
  %457 = vrot.lane.b32.xlu0 %v439, 84
  %v458 = vpop.permute.xlu0 %457
  %459 = vrot.lane.b32.xlu0 %v440, 84
  %v460 = vpop.permute.xlu0 %459
  %461 = vrot.lane.b32.xlu0 %v441, 84
  %v462 = vpop.permute.xlu0 %461
  %463 = vrot.lane.b32.xlu0 %v442, 84
  %v464 = vpop.permute.xlu0 %463
  %465 = vrot.lane.b32.xlu0 %v443, 84
  %v466 = vpop.permute.xlu0 %465
  %467 = vrot.lane.b32.xlu0 %v444, 84
  %v468 = vpop.permute.xlu0 %467
  %v493 = vunpack.c.l.b16 %v133
  %v494 = vunpack.c.l.b16 %v134
  %v495 = vunpack.c.l.b16 %v135
  %v496 = vunpack.c.l.b16 %v136
  %v497 = vunpack.c.l.b16 %v137
  %v498 = vunpack.c.l.b16 %v138
  %v499 = vunpack.c.l.b16 %v139
  %v500 = vunpack.c.l.b16 %v140
  %v501 = vunpack.c.l.b16 %v141
  %v502 = vunpack.c.l.b16 %v142
  %v503 = vunpack.c.l.b16 %v143
  %v504 = vunpack.c.l.b16 %v144
  %v505 = vunpack.c.l.b16 %v145
  %v506 = vunpack.c.l.b16 %v146
  %v507 = vunpack.c.l.b16 %v147
  %v508 = vunpack.c.l.b16 %v148
  %v509 = vunpack.c.l.b16 %v149
  %v510 = vunpack.c.l.b16 %v150
  %v511 = vunpack.c.l.b16 %v151
  %v512 = vunpack.c.l.b16 %v152
  %v513 = vunpack.c.l.b16 %v153
  %v514 = vunpack.c.l.b16 %v154
  %v515 = vunpack.c.l.b16 %v155
  %v516 = vunpack.c.l.b16 %v156
  %v517 = vpack.c.b16 %v494, %v493
  %v518 = vpack.c.b16 %v496, %v495
  %v519 = vpack.c.b16 %v498, %v497
  %v520 = vpack.c.b16 %v500, %v499
  %v521 = vpack.c.b16 %v502, %v501
  %v522 = vpack.c.b16 %v504, %v503
  %v523 = vpack.c.b16 %v506, %v505
  %v524 = vpack.c.b16 %v508, %v507
  %v525 = vpack.c.b16 %v510, %v509
  %v526 = vpack.c.b16 %v512, %v511
  %v527 = vpack.c.b16 %v514, %v513
  %v528 = vpack.c.b16 %v516, %v515
  %529 = vrot.lane.b32.xlu0 %v517, 112
  %v530 = vpop.permute.xlu0 %529
  %531 = vrot.lane.b32.xlu0 %v518, 112
  %v532 = vpop.permute.xlu0 %531
  %533 = vrot.lane.b32.xlu0 %v519, 112
  %v534 = vpop.permute.xlu0 %533
  %535 = vrot.lane.b32.xlu0 %v520, 112
  %v536 = vpop.permute.xlu0 %535
  %537 = vrot.lane.b32.xlu0 %v521, 112
  %v538 = vpop.permute.xlu0 %537
  %539 = vrot.lane.b32.xlu0 %v522, 112
  %v540 = vpop.permute.xlu0 %539
  %541 = vrot.lane.b32.xlu0 %v523, 112
  %v542 = vpop.permute.xlu0 %541
  %543 = vrot.lane.b32.xlu0 %v524, 112
  %v544 = vpop.permute.xlu0 %543
  %545 = vrot.lane.b32.xlu0 %v525, 112
  %v546 = vpop.permute.xlu0 %545
  %547 = vrot.lane.b32.xlu0 %v526, 112
  %v548 = vpop.permute.xlu0 %547
  %549 = vrot.lane.b32.xlu0 %v527, 112
  %v550 = vpop.permute.xlu0 %549
  %551 = vrot.lane.b32.xlu0 %v528, 112
  %v552 = vpop.permute.xlu0 %551
  %vm553 = vcmask 228352
  %v556 = vsel %vm553, %v205, %v278
  %v559 = vsel %vm553, %v206, %v280
  %v562 = vsel %vm553, %v207, %v282
  %v565 = vsel %vm553, %v208, %v284
  %v568 = vsel %vm553, %v209, %v286
  %v571 = vsel %vm553, %v210, %v288
  %v574 = vsel %vm553, %v211, %v290
  %v577 = vsel %vm553, %v212, %v292
  %v580 = vsel %vm553, %v213, %v294
  %v583 = vsel %vm553, %v214, %v296
  %v586 = vsel %vm553, %v215, %v298
  %v589 = vsel %vm553, %v216, %v300
  %vm590 = vcmask 457728
  %v592 = vsel %vm590, %v556, %v362
  %v594 = vsel %vm590, %v559, %v364
  %v596 = vsel %vm590, %v562, %v366
  %v598 = vsel %vm590, %v565, %v368
  %v600 = vsel %vm590, %v568, %v370
  %v602 = vsel %vm590, %v571, %v372
  %v604 = vsel %vm590, %v574, %v374
  %v606 = vsel %vm590, %v577, %v376
  %v608 = vsel %vm590, %v580, %v378
  %v610 = vsel %vm590, %v583, %v380
  %v612 = vsel %vm590, %v586, %v382
  %v614 = vsel %vm590, %v589, %v384
  %vm615 = vcmask 687104
  %v617 = vsel %vm615, %v592, %v446
  %v619 = vsel %vm615, %v594, %v448
  %v621 = vsel %vm615, %v596, %v450
  %v623 = vsel %vm615, %v598, %v452
  %v625 = vsel %vm615, %v600, %v454
  %v627 = vsel %vm615, %v602, %v456
  %v629 = vsel %vm615, %v604, %v458
  %v631 = vsel %vm615, %v606, %v460
  %v633 = vsel %vm615, %v608, %v462
  %v635 = vsel %vm615, %v610, %v464
  %v637 = vsel %vm615, %v612, %v466
  %v639 = vsel %vm615, %v614, %v468
  %vm640 = vcmask 916480
  %v642 = vsel %vm640, %v617, %v530
  %v645 = vsel %vm640, %v619, %v532
  %v648 = vsel %vm640, %v621, %v534
  %v651 = vsel %vm640, %v623, %v536
  %v654 = vsel %vm640, %v625, %v538
  %v657 = vsel %vm640, %v627, %v540
  %v660 = vsel %vm640, %v629, %v542
  %v663 = vsel %vm640, %v631, %v544
  %v666 = vsel %vm640, %v633, %v546
  %v669 = vsel %vm640, %v635, %v548
  %v672 = vsel %vm640, %v637, %v550
  %v675 = vsel %vm640, %v639, %v552
  %v677 = vld [vmem:[%s1] sm:$0xf]
  %v678 = vld [vmem:[%s1 + $0x4] sm:$0xf]
  %v679 = vld [vmem:[%s1 + $0x8] sm:$0xf]
  %v680 = vld [vmem:[%s1 + $0xc] sm:$0xf]
  %v681 = vld [vmem:[%s1 + $0x10] sm:$0xf]
  %v682 = vld [vmem:[%s1 + $0x14] sm:$0xf]
  %v683 = vld [vmem:[%s1 + $0x18] sm:$0xf]
  %v684 = vld [vmem:[%s1 + $0x1c] sm:$0xf]
  %v685 = vld [vmem:[%s1 + $0x20] sm:$0xf]
  %v686 = vld [vmem:[%s1 + $0x24] sm:$0xf]
  %v687 = vld [vmem:[%s1 + $0x28] sm:$0xf]
  %v688 = vld [vmem:[%s1 + $0x2c] sm:$0xf]
  %v689 = vld [vmem:[%s1 + $0x30] sm:$0xf]
  %v690 = vld [vmem:[%s1 + $0x34] sm:$0xf]
  %v691 = vld [vmem:[%s1 + $0x38] sm:$0xf]
  %v692 = vld [vmem:[%s1 + $0x3c] sm:$0xf]
  %v693 = vld [vmem:[%s1 + $0x40] sm:$0xf]
  %v694 = vld [vmem:[%s1 + $0x44] sm:$0x3]
  %v713 = vunpack.c.l.b16 %v677
  %v714 = vunpack.c.l.b16 %v678
  %v715 = vunpack.c.l.b16 %v679
  %v716 = vunpack.c.l.b16 %v680
  %v717 = vunpack.c.l.b16 %v681
  %v718 = vunpack.c.l.b16 %v682
  %v719 = vunpack.c.l.b16 %v683
  %v720 = vunpack.c.l.b16 %v684
  %v721 = vunpack.c.l.b16 %v685
  %v722 = vunpack.c.l.b16 %v686
  %v723 = vunpack.c.l.b16 %v687
  %v724 = vunpack.c.l.b16 %v688
  %v725 = vunpack.c.l.b16 %v689
  %v726 = vunpack.c.l.b16 %v690
  %v727 = vunpack.c.l.b16 %v691
  %v728 = vunpack.c.l.b16 %v692
  %v729 = vunpack.c.l.b16 %v693
  %v730 = vunpack.c.l.b16 %v694
  %v731 = vpack.c.b16 %v714, %v713
  %v732 = vpack.c.b16 %v716, %v715
  %v733 = vpack.c.b16 %v718, %v717
  %v734 = vpack.c.b16 %v720, %v719
  %v735 = vpack.c.b16 %v722, %v721
  %v736 = vpack.c.b16 %v724, %v723
  %v737 = vpack.c.b16 %v726, %v725
  %v738 = vpack.c.b16 %v728, %v727
  %v739 = vpack.c.b16 %v730, %v729
  %vm748 = vcmask 97280
  %v749 = vsel %vm748, %v530, 0
  %v751 = vsel %vm748, %v532, 0
  %v753 = vsel %vm748, %v534, 0
  %v755 = vsel %vm748, %v536, 0
  %v757 = vsel %vm748, %v538, 0
  %v759 = vsel %vm748, %v540, 0
  %v761 = vsel %vm748, %v542, 0
  %v763 = vsel %vm748, %v544, 0
  %v765 = vsel %vm748, %v546, 0
  %v767 = vsel %vm748, %v548, 0
  %v769 = vsel %vm748, %v550, 0
  %v771 = vsel %vm748, %v552, 0
  %vm773 = vcmask 1045504
  %v775 = vsel %vm773, %v739, 0
  %777 = vmatpush.bf16.msra.mxu0 %v738
  %778 = vmatpush.bf16.msra.mxu0 %v737
  %779 = vmatpush.bf16.msra.mxu0 %v736
  %780 = vmatpush.bf16.msra.mxu0 %v735
  %781 = vmatpush.bf16.msra.mxu0 %v734
  %782 = vmatpush.bf16.msra.mxu0 %v733
  %783 = vmatpush.bf16.msra.mxu0 %v732
  %784 = vmatpush.bf16.msra.mxu0 %v731
  %785 = vmatmul.bf16.gmra.mxu0 %v642
  %v786 = vpop.f32.mrf.mxu0
  %v787 = vadd.f32 0.0, %v786
  %v788 = vpop.f32.mrf.mxu0
  %v789 = vadd.f32 0.0, %v788
  %790 = vmatmul.bf16.gmra.mxu0 %v645
  %v791 = vpop.f32.mrf.mxu0
  %v792 = vadd.f32 0.0, %v791
  %v793 = vpop.f32.mrf.mxu0
  %v794 = vadd.f32 0.0, %v793
  %795 = vmatmul.bf16.gmra.mxu0 %v648
  %v796 = vpop.f32.mrf.mxu0
  %v797 = vadd.f32 0.0, %v796
  %v798 = vpop.f32.mrf.mxu0
  %v799 = vadd.f32 0.0, %v798
  %800 = vmatmul.bf16.gmra.mxu0 %v651
  %v801 = vpop.f32.mrf.mxu0
  %v802 = vadd.f32 0.0, %v801
  %v803 = vpop.f32.mrf.mxu0
  %v804 = vadd.f32 0.0, %v803
  %805 = vmatmul.bf16.gmra.mxu0 %v654
  %v806 = vpop.f32.mrf.mxu0
  %v807 = vadd.f32 0.0, %v806
  %v808 = vpop.f32.mrf.mxu0
  %v809 = vadd.f32 0.0, %v808
  %810 = vmatmul.bf16.gmra.mxu0 %v657
  %v811 = vpop.f32.mrf.mxu0
  %v812 = vadd.f32 0.0, %v811
  %v813 = vpop.f32.mrf.mxu0
  %v814 = vadd.f32 0.0, %v813
  %815 = vmatmul.bf16.gmra.mxu0 %v660
  %v816 = vpop.f32.mrf.mxu0
  %v817 = vadd.f32 0.0, %v816
  %v818 = vpop.f32.mrf.mxu0
  %v819 = vadd.f32 0.0, %v818
  %820 = vmatmul.bf16.gmra.mxu0 %v663
  %v821 = vpop.f32.mrf.mxu0
  %v822 = vadd.f32 0.0, %v821
  %v823 = vpop.f32.mrf.mxu0
  %v824 = vadd.f32 0.0, %v823
  %825 = vmatmul.bf16.gmra.mxu0 %v666
  %v826 = vpop.f32.mrf.mxu0
  %v827 = vadd.f32 0.0, %v826
  %v828 = vpop.f32.mrf.mxu0
  %v829 = vadd.f32 0.0, %v828
  %830 = vmatmul.bf16.gmra.mxu0 %v669
  %v831 = vpop.f32.mrf.mxu0
  %v832 = vadd.f32 0.0, %v831
  %v833 = vpop.f32.mrf.mxu0
  %v834 = vadd.f32 0.0, %v833
  %835 = vmatmul.bf16.gmra.mxu0 %v672
  %v836 = vpop.f32.mrf.mxu0
  %v837 = vadd.f32 0.0, %v836
  %v838 = vpop.f32.mrf.mxu0
  %v839 = vadd.f32 0.0, %v838
  %840 = vmatmul.bf16.gmra.mxu0 %v675
  %v841 = vpop.f32.mrf.mxu0
  %v842 = vadd.f32 0.0, %v841
  %v843 = vpop.f32.mrf.mxu0
  %v844 = vadd.f32 0.0, %v843
  %845 = vdwg.mxu0
  %846 = vmatpush.bf16.msra.mxu0 0
  %847 = vmatpush.bf16.msra.mxu0 0
  %848 = vmatpush.bf16.msra.mxu0 0
  %849 = vmatpush.bf16.msra.mxu0 0
  %850 = vmatpush.bf16.msra.mxu0 0
  %851 = vmatpush.bf16.msra.mxu0 0
  %852 = vmatpush.bf16.msra.mxu0 0
  %853 = vmatpush.bf16.msra.mxu0 %v775
  %854 = vmatmul.bf16.gmra.mxu0 %v749
  %v855 = vpop.f32.mrf.mxu0
  %v856 = vadd.f32 %v787, %v855
  %v857 = vpop.f32.mrf.mxu0
  %v858 = vadd.f32 %v789, %v857
  %859 = vmatmul.bf16.gmra.mxu0 %v751
  %v860 = vpop.f32.mrf.mxu0
  %v861 = vadd.f32 %v792, %v860
  %v862 = vpop.f32.mrf.mxu0
  %v863 = vadd.f32 %v794, %v862
  %864 = vmatmul.bf16.gmra.mxu0 %v753
  %v865 = vpop.f32.mrf.mxu0
  %v866 = vadd.f32 %v797, %v865
  %v867 = vpop.f32.mrf.mxu0
  %v868 = vadd.f32 %v799, %v867
  %869 = vmatmul.bf16.gmra.mxu0 %v755
  %v870 = vpop.f32.mrf.mxu0
  %v871 = vadd.f32 %v802, %v870
  %v872 = vpop.f32.mrf.mxu0
  %v873 = vadd.f32 %v804, %v872
  %874 = vmatmul.bf16.gmra.mxu0 %v757
  %v875 = vpop.f32.mrf.mxu0
  %v876 = vadd.f32 %v807, %v875
  %v877 = vpop.f32.mrf.mxu0
  %v878 = vadd.f32 %v809, %v877
  %879 = vmatmul.bf16.gmra.mxu0 %v759
  %v880 = vpop.f32.mrf.mxu0
  %v881 = vadd.f32 %v812, %v880
  %v882 = vpop.f32.mrf.mxu0
  %v883 = vadd.f32 %v814, %v882
  %884 = vmatmul.bf16.gmra.mxu0 %v761
  %v885 = vpop.f32.mrf.mxu0
  %v886 = vadd.f32 %v817, %v885
  %v887 = vpop.f32.mrf.mxu0
  %v888 = vadd.f32 %v819, %v887
  %889 = vmatmul.bf16.gmra.mxu0 %v763
  %v890 = vpop.f32.mrf.mxu0
  %v891 = vadd.f32 %v822, %v890
  %v892 = vpop.f32.mrf.mxu0
  %v893 = vadd.f32 %v824, %v892
  %894 = vmatmul.bf16.gmra.mxu0 %v765
  %v895 = vpop.f32.mrf.mxu0
  %v896 = vadd.f32 %v827, %v895
  %v897 = vpop.f32.mrf.mxu0
  %v898 = vadd.f32 %v829, %v897
  %899 = vmatmul.bf16.gmra.mxu0 %v767
  %v900 = vpop.f32.mrf.mxu0
  %v901 = vadd.f32 %v832, %v900
  %v902 = vpop.f32.mrf.mxu0
  %v903 = vadd.f32 %v834, %v902
  %904 = vmatmul.bf16.gmra.mxu0 %v769
  %v905 = vpop.f32.mrf.mxu0
  %v906 = vadd.f32 %v837, %v905
  %v907 = vpop.f32.mrf.mxu0
  %v908 = vadd.f32 %v839, %v907
  %909 = vmatmul.bf16.gmra.mxu0 %v771
  %v910 = vpop.f32.mrf.mxu0
  %v911 = vadd.f32 %v842, %v910
  %v912 = vpop.f32.mrf.mxu0
  %v913 = vadd.f32 %v844, %v912
  %914 = vdwg.mxu0
  %s915 = scalar_lea.vmem %s1, 72
  %v916 = vld [vmem:[%s915] sm:$0xf]
  %v917 = vld [vmem:[%s915 + $0x4] sm:$0xf]
  %v918 = vld [vmem:[%s915 + $0x8] sm:$0xf]
  %v919 = vld [vmem:[%s915 + $0xc] sm:$0xf]
  %v920 = vld [vmem:[%s915 + $0x10] sm:$0xf]
  %v921 = vld [vmem:[%s915 + $0x14] sm:$0xf]
  %v922 = vld [vmem:[%s915 + $0x18] sm:$0xf]
  %v923 = vld [vmem:[%s915 + $0x1c] sm:$0xf]
  %v924 = vld [vmem:[%s915 + $0x20] sm:$0xf]
  %v925 = vld [vmem:[%s915 + $0x24] sm:$0xf]
  %v926 = vld [vmem:[%s915 + $0x28] sm:$0xf]
  %v927 = vld [vmem:[%s915 + $0x2c] sm:$0xf]
  %v928 = vld [vmem:[%s915 + $0x30] sm:$0xf]
  %v929 = vld [vmem:[%s915 + $0x34] sm:$0xf]
  %v930 = vld [vmem:[%s915 + $0x38] sm:$0xf]
  %v931 = vld [vmem:[%s915 + $0x3c] sm:$0xf]
  %v932 = vld [vmem:[%s915 + $0x40] sm:$0xf]
  %v933 = vld [vmem:[%s915 + $0x44] sm:$0x3]
  %v952 = vunpack.c.l.b16 %v916
  %v953 = vunpack.c.l.b16 %v917
  %v954 = vunpack.c.l.b16 %v918
  %v955 = vunpack.c.l.b16 %v919
  %v956 = vunpack.c.l.b16 %v920
  %v957 = vunpack.c.l.b16 %v921
  %v958 = vunpack.c.l.b16 %v922
  %v959 = vunpack.c.l.b16 %v923
  %v960 = vunpack.c.l.b16 %v924
  %v961 = vunpack.c.l.b16 %v925
  %v962 = vunpack.c.l.b16 %v926
  %v963 = vunpack.c.l.b16 %v927
  %v964 = vunpack.c.l.b16 %v928
  %v965 = vunpack.c.l.b16 %v929
  %v966 = vunpack.c.l.b16 %v930
  %v967 = vunpack.c.l.b16 %v931
  %v968 = vunpack.c.l.b16 %v932
  %v969 = vunpack.c.l.b16 %v933
  %v970 = vpack.c.b16 %v953, %v952
  %v971 = vpack.c.b16 %v955, %v954
  %v972 = vpack.c.b16 %v957, %v956
  %v973 = vpack.c.b16 %v959, %v958
  %v974 = vpack.c.b16 %v961, %v960
  %v975 = vpack.c.b16 %v963, %v962
  %v976 = vpack.c.b16 %v965, %v964
  %v977 = vpack.c.b16 %v967, %v966
  %v978 = vpack.c.b16 %v969, %v968
  %v988 = vsel %vm773, %v978, 0
  %990 = vmatpush.bf16.msra.mxu0 %v977
  %991 = vmatpush.bf16.msra.mxu0 %v976
  %992 = vmatpush.bf16.msra.mxu0 %v975
  %993 = vmatpush.bf16.msra.mxu0 %v974
  %994 = vmatpush.bf16.msra.mxu0 %v973
  %995 = vmatpush.bf16.msra.mxu0 %v972
  %996 = vmatpush.bf16.msra.mxu0 %v971
  %997 = vmatpush.bf16.msra.mxu0 %v970
  %998 = vmatmul.bf16.gmra.mxu0 %v642
  %v999 = vpop.f32.mrf.mxu0
  %v1000 = vadd.f32 0.0, %v999
  %v1001 = vpop.f32.mrf.mxu0
  %v1002 = vadd.f32 0.0, %v1001
  %1003 = vmatmul.bf16.gmra.mxu0 %v645
  %v1004 = vpop.f32.mrf.mxu0
  %v1005 = vadd.f32 0.0, %v1004
  %v1006 = vpop.f32.mrf.mxu0
  %v1007 = vadd.f32 0.0, %v1006
  %1008 = vmatmul.bf16.gmra.mxu0 %v648
  %v1009 = vpop.f32.mrf.mxu0
  %v1010 = vadd.f32 0.0, %v1009
  %v1011 = vpop.f32.mrf.mxu0
  %v1012 = vadd.f32 0.0, %v1011
  %1013 = vmatmul.bf16.gmra.mxu0 %v651
  %v1014 = vpop.f32.mrf.mxu0
  %v1015 = vadd.f32 0.0, %v1014
  %v1016 = vpop.f32.mrf.mxu0
  %v1017 = vadd.f32 0.0, %v1016
  %1018 = vmatmul.bf16.gmra.mxu0 %v654
  %v1019 = vpop.f32.mrf.mxu0
  %v1020 = vadd.f32 0.0, %v1019
  %v1021 = vpop.f32.mrf.mxu0
  %v1022 = vadd.f32 0.0, %v1021
  %1023 = vmatmul.bf16.gmra.mxu0 %v657
  %v1024 = vpop.f32.mrf.mxu0
  %v1025 = vadd.f32 0.0, %v1024
  %v1026 = vpop.f32.mrf.mxu0
  %v1027 = vadd.f32 0.0, %v1026
  %1028 = vmatmul.bf16.gmra.mxu0 %v660
  %v1029 = vpop.f32.mrf.mxu0
  %v1030 = vadd.f32 0.0, %v1029
  %v1031 = vpop.f32.mrf.mxu0
  %v1032 = vadd.f32 0.0, %v1031
  %1033 = vmatmul.bf16.gmra.mxu0 %v663
  %v1034 = vpop.f32.mrf.mxu0
  %v1035 = vadd.f32 0.0, %v1034
  %v1036 = vpop.f32.mrf.mxu0
  %v1037 = vadd.f32 0.0, %v1036
  %1038 = vmatmul.bf16.gmra.mxu0 %v666
  %v1039 = vpop.f32.mrf.mxu0
  %v1040 = vadd.f32 0.0, %v1039
  %v1041 = vpop.f32.mrf.mxu0
  %v1042 = vadd.f32 0.0, %v1041
  %1043 = vmatmul.bf16.gmra.mxu0 %v669
  %v1044 = vpop.f32.mrf.mxu0
  %v1045 = vadd.f32 0.0, %v1044
  %v1046 = vpop.f32.mrf.mxu0
  %v1047 = vadd.f32 0.0, %v1046
  %1048 = vmatmul.bf16.gmra.mxu0 %v672
  %v1049 = vpop.f32.mrf.mxu0
  %v1050 = vadd.f32 0.0, %v1049
  %v1051 = vpop.f32.mrf.mxu0
  %v1052 = vadd.f32 0.0, %v1051
  %1053 = vmatmul.bf16.gmra.mxu0 %v675
  %v1054 = vpop.f32.mrf.mxu0
  %v1055 = vadd.f32 0.0, %v1054
  %v1056 = vpop.f32.mrf.mxu0
  %v1057 = vadd.f32 0.0, %v1056
  %1058 = vdwg.mxu0
  %1059 = vmatpush.bf16.msra.mxu0 0
  %1060 = vmatpush.bf16.msra.mxu0 0
  %1061 = vmatpush.bf16.msra.mxu0 0
  %1062 = vmatpush.bf16.msra.mxu0 0
  %1063 = vmatpush.bf16.msra.mxu0 0
  %1064 = vmatpush.bf16.msra.mxu0 0
  %1065 = vmatpush.bf16.msra.mxu0 0
  %1066 = vmatpush.bf16.msra.mxu0 %v988
  %1067 = vmatmul.bf16.gmra.mxu0 %v749
  %v1068 = vpop.f32.mrf.mxu0
  %v1069 = vadd.f32 %v1000, %v1068
  %v1070 = vpop.f32.mrf.mxu0
  %v1071 = vadd.f32 %v1002, %v1070
  %1072 = vmatmul.bf16.gmra.mxu0 %v751
  %v1073 = vpop.f32.mrf.mxu0
  %v1074 = vadd.f32 %v1005, %v1073
  %v1075 = vpop.f32.mrf.mxu0
  %v1076 = vadd.f32 %v1007, %v1075
  %1077 = vmatmul.bf16.gmra.mxu0 %v753
  %v1078 = vpop.f32.mrf.mxu0
  %v1079 = vadd.f32 %v1010, %v1078
  %v1080 = vpop.f32.mrf.mxu0
  %v1081 = vadd.f32 %v1012, %v1080
  %1082 = vmatmul.bf16.gmra.mxu0 %v755
  %v1083 = vpop.f32.mrf.mxu0
  %v1084 = vadd.f32 %v1015, %v1083
  %v1085 = vpop.f32.mrf.mxu0
  %v1086 = vadd.f32 %v1017, %v1085
  %1087 = vmatmul.bf16.gmra.mxu0 %v757
  %v1088 = vpop.f32.mrf.mxu0
  %v1089 = vadd.f32 %v1020, %v1088
  %v1090 = vpop.f32.mrf.mxu0
  %v1091 = vadd.f32 %v1022, %v1090
  %1092 = vmatmul.bf16.gmra.mxu0 %v759
  %v1093 = vpop.f32.mrf.mxu0
  %v1094 = vadd.f32 %v1025, %v1093
  %v1095 = vpop.f32.mrf.mxu0
  %v1096 = vadd.f32 %v1027, %v1095
  %1097 = vmatmul.bf16.gmra.mxu0 %v761
  %v1098 = vpop.f32.mrf.mxu0
  %v1099 = vadd.f32 %v1030, %v1098
  %v1100 = vpop.f32.mrf.mxu0
  %v1101 = vadd.f32 %v1032, %v1100
  %1102 = vmatmul.bf16.gmra.mxu0 %v763
  %v1103 = vpop.f32.mrf.mxu0
  %v1104 = vadd.f32 %v1035, %v1103
  %v1105 = vpop.f32.mrf.mxu0
  %v1106 = vadd.f32 %v1037, %v1105
  %1107 = vmatmul.bf16.gmra.mxu0 %v765
  %v1108 = vpop.f32.mrf.mxu0
  %v1109 = vadd.f32 %v1040, %v1108
  %v1110 = vpop.f32.mrf.mxu0
  %v1111 = vadd.f32 %v1042, %v1110
  %1112 = vmatmul.bf16.gmra.mxu0 %v767
  %v1113 = vpop.f32.mrf.mxu0
  %v1114 = vadd.f32 %v1045, %v1113
  %v1115 = vpop.f32.mrf.mxu0
  %v1116 = vadd.f32 %v1047, %v1115
  %1117 = vmatmul.bf16.gmra.mxu0 %v769
  %v1118 = vpop.f32.mrf.mxu0
  %v1119 = vadd.f32 %v1050, %v1118
  %v1120 = vpop.f32.mrf.mxu0
  %v1121 = vadd.f32 %v1052, %v1120
  %1122 = vmatmul.bf16.gmra.mxu0 %v771
  %v1123 = vpop.f32.mrf.mxu0
  %v1124 = vadd.f32 %v1055, %v1123
  %v1125 = vpop.f32.mrf.mxu0
  %v1126 = vadd.f32 %v1057, %v1125
  %1127 = vdwg.mxu0
  %v1128 = vmax.f32 %v856, %v1069
  %v1129 = vmax.f32 %v858, %v1071
  %v1130 = vmax.f32 %v861, %v1074
  %v1131 = vmax.f32 %v863, %v1076
  %v1132 = vmax.f32 %v866, %v1079
  %v1133 = vmax.f32 %v868, %v1081
  %v1134 = vmax.f32 %v871, %v1084
  %v1135 = vmax.f32 %v873, %v1086
  %v1136 = vmax.f32 %v876, %v1089
  %v1137 = vmax.f32 %v878, %v1091
  %v1138 = vmax.f32 %v881, %v1094
  %v1139 = vmax.f32 %v883, %v1096
  %v1140 = vmax.f32 %v886, %v1099
  %v1141 = vmax.f32 %v888, %v1101
  %v1142 = vmax.f32 %v891, %v1104
  %v1143 = vmax.f32 %v893, %v1106
  %v1144 = vmax.f32 %v896, %v1109
  %v1145 = vmax.f32 %v898, %v1111
  %v1146 = vmax.f32 %v901, %v1114
  %v1147 = vmax.f32 %v903, %v1116
  %v1148 = vmax.f32 %v906, %v1119
  %v1149 = vmax.f32 %v908, %v1121
  %v1150 = vmax.f32 %v911, %v1124
  %v1151 = vmax.f32 %v913, %v1126
  %v1152 = vld [vmem:[%s2] sm:$0x1]
  %v1153 = vmax.f32 %v1128, %v1129
  %v1155 = vperm.slane %v1152, 0
  %v1157 = vadd.f32 %v1153, %v1155
  %v1158 = vmax.f32 %v1157, 0.0
  %v1159 = vmax.f32 %v1130, %v1131
  %v1160 = vadd.f32 %v1159, %v1155
  %v1161 = vmax.f32 %v1160, 0.0
  %v1162 = vmax.f32 %v1132, %v1133
  %v1163 = vadd.f32 %v1162, %v1155
  %v1164 = vmax.f32 %v1163, 0.0
  %v1165 = vmax.f32 %v1134, %v1135
  %v1166 = vadd.f32 %v1165, %v1155
  %v1167 = vmax.f32 %v1166, 0.0
  %v1168 = vmax.f32 %v1136, %v1137
  %v1169 = vadd.f32 %v1168, %v1155
  %v1170 = vmax.f32 %v1169, 0.0
  %v1171 = vmax.f32 %v1138, %v1139
  %v1172 = vadd.f32 %v1171, %v1155
  %v1173 = vmax.f32 %v1172, 0.0
  %v1174 = vmax.f32 %v1140, %v1141
  %v1175 = vadd.f32 %v1174, %v1155
  %v1176 = vmax.f32 %v1175, 0.0
  %v1177 = vmax.f32 %v1142, %v1143
  %v1178 = vadd.f32 %v1177, %v1155
  %v1179 = vmax.f32 %v1178, 0.0
  %v1180 = vmax.f32 %v1144, %v1145
  %v1181 = vadd.f32 %v1180, %v1155
  %v1182 = vmax.f32 %v1181, 0.0
  %v1183 = vmax.f32 %v1146, %v1147
  %v1184 = vadd.f32 %v1183, %v1155
  %v1185 = vmax.f32 %v1184, 0.0
  %v1186 = vmax.f32 %v1148, %v1149
  %v1187 = vadd.f32 %v1186, %v1155
  %v1188 = vmax.f32 %v1187, 0.0
  %v1189 = vmax.f32 %v1150, %v1151
  %v1190 = vadd.f32 %v1189, %v1155
  %v1191 = vmax.f32 %v1190, 0.0
  %1200 = vrot.lane.b32.xlu0 %v1161, 120
  %v1201 = vpop.permute.xlu0 %1200
  %1202 = vrot.lane.b32.xlu0 %v1164, 120
  %v1203 = vpop.permute.xlu0 %1202
  %1204 = vrot.lane.b32.xlu0 %v1167, 120
  %v1205 = vpop.permute.xlu0 %1204
  %1206 = vrot.lane.b32.xlu0 %v1170, 120
  %v1207 = vpop.permute.xlu0 %1206
  %1208 = vrot.lane.b32.xlu0 %v1173, 120
  %v1209 = vpop.permute.xlu0 %1208
  %1210 = vrot.lane.b32.xlu0 %v1176, 120
  %v1211 = vpop.permute.xlu0 %1210
  %1212 = vrot.lane.b32.xlu0 %v1179, 120
  %v1213 = vpop.permute.xlu0 %1212
  %1214 = vrot.lane.b32.xlu0 %v1182, 120
  %v1215 = vpop.permute.xlu0 %1214
  %1225 = vrot.lane.b32.xlu0 %v1164, 112
  %v1226 = vpop.permute.xlu0 %1225
  %1227 = vrot.lane.b32.xlu0 %v1167, 112
  %v1228 = vpop.permute.xlu0 %1227
  %1229 = vrot.lane.b32.xlu0 %v1170, 112
  %v1230 = vpop.permute.xlu0 %1229
  %1231 = vrot.lane.b32.xlu0 %v1173, 112
  %v1232 = vpop.permute.xlu0 %1231
  %1233 = vrot.lane.b32.xlu0 %v1176, 112
  %v1234 = vpop.permute.xlu0 %1233
  %1235 = vrot.lane.b32.xlu0 %v1179, 112
  %v1236 = vpop.permute.xlu0 %1235
  %1237 = vrot.lane.b32.xlu0 %v1182, 112
  %v1238 = vpop.permute.xlu0 %1237
  %1239 = vrot.lane.b32.xlu0 %v1185, 112
  %v1240 = vpop.permute.xlu0 %1239
  %1250 = vrot.lane.b32.xlu0 %v1167, 104
  %v1251 = vpop.permute.xlu0 %1250
  %1252 = vrot.lane.b32.xlu0 %v1170, 104
  %v1253 = vpop.permute.xlu0 %1252
  %1254 = vrot.lane.b32.xlu0 %v1173, 104
  %v1255 = vpop.permute.xlu0 %1254
  %1256 = vrot.lane.b32.xlu0 %v1176, 104
  %v1257 = vpop.permute.xlu0 %1256
  %1258 = vrot.lane.b32.xlu0 %v1179, 104
  %v1259 = vpop.permute.xlu0 %1258
  %1260 = vrot.lane.b32.xlu0 %v1182, 104
  %v1261 = vpop.permute.xlu0 %1260
  %1262 = vrot.lane.b32.xlu0 %v1185, 104
  %v1263 = vpop.permute.xlu0 %1262
  %1264 = vrot.lane.b32.xlu0 %v1188, 104
  %v1265 = vpop.permute.xlu0 %1264
  %1275 = vrot.lane.b32.xlu0 %v1170, 96
  %v1276 = vpop.permute.xlu0 %1275
  %1277 = vrot.lane.b32.xlu0 %v1173, 96
  %v1278 = vpop.permute.xlu0 %1277
  %1279 = vrot.lane.b32.xlu0 %v1176, 96
  %v1280 = vpop.permute.xlu0 %1279
  %1281 = vrot.lane.b32.xlu0 %v1179, 96
  %v1282 = vpop.permute.xlu0 %1281
  %1283 = vrot.lane.b32.xlu0 %v1182, 96
  %v1284 = vpop.permute.xlu0 %1283
  %1285 = vrot.lane.b32.xlu0 %v1185, 96
  %v1286 = vpop.permute.xlu0 %1285
  %1287 = vrot.lane.b32.xlu0 %v1188, 96
  %v1288 = vpop.permute.xlu0 %1287
  %1289 = vrot.lane.b32.xlu0 %v1191, 96
  %v1290 = vpop.permute.xlu0 %1289
  %vm1299 = vcmask 982016
  %v1300 = vsel %vm1299, %v1158, %v1201
  %v1301 = vsel %vm1299, %v1161, %v1203
  %v1302 = vsel %vm1299, %v1164, %v1205
  %v1303 = vsel %vm1299, %v1167, %v1207
  %v1304 = vsel %vm1299, %v1170, %v1209
  %v1305 = vsel %vm1299, %v1173, %v1211
  %v1306 = vsel %vm1299, %v1176, %v1213
  %v1307 = vsel %vm1299, %v1179, %v1215
  %v1308 = vsel %vm640, %v1201, %v1226
  %v1309 = vsel %vm640, %v1203, %v1228
  %v1310 = vsel %vm640, %v1205, %v1230
  %v1311 = vsel %vm640, %v1207, %v1232
  %v1312 = vsel %vm640, %v1209, %v1234
  %v1313 = vsel %vm640, %v1211, %v1236
  %v1314 = vsel %vm640, %v1213, %v1238
  %v1315 = vsel %vm640, %v1215, %v1240
  %vm1316 = vcmask 850944
  %v1317 = vsel %vm1316, %v1226, %v1251
  %v1318 = vsel %vm1316, %v1228, %v1253
  %v1319 = vsel %vm1316, %v1230, %v1255
  %v1320 = vsel %vm1316, %v1232, %v1257
  %v1321 = vsel %vm1316, %v1234, %v1259
  %v1322 = vsel %vm1316, %v1236, %v1261
  %v1323 = vsel %vm1316, %v1238, %v1263
  %v1324 = vsel %vm1316, %v1240, %v1265
  %vm1325 = vcmask 785408
  %v1326 = vsel %vm1325, %v1251, %v1276
  %v1327 = vsel %vm1325, %v1253, %v1278
  %v1328 = vsel %vm1325, %v1255, %v1280
  %v1329 = vsel %vm1325, %v1257, %v1282
  %v1330 = vsel %vm1325, %v1259, %v1284
  %v1331 = vsel %vm1325, %v1261, %v1286
  %v1332 = vsel %vm1325, %v1263, %v1288
  %v1333 = vsel %vm1325, %v1265, %v1290
  %v1334 = vpack.c.bf16 %v1301, %v1300
  %v1335 = vpack.c.bf16 %v1309, %v1308
  %v1336 = vpack.c.bf16 %v1318, %v1317
  %v1337 = vpack.c.bf16 %v1327, %v1326
  %v1338 = vpack.c.bf16 %v1278, %v1276
  %v1339 = vpack.c.bf16 %v1303, %v1302
  %v1340 = vpack.c.bf16 %v1311, %v1310
  %v1341 = vpack.c.bf16 %v1320, %v1319
  %v1342 = vpack.c.bf16 %v1329, %v1328
  %v1343 = vpack.c.bf16 %v1282, %v1280
  %v1344 = vpack.c.bf16 %v1305, %v1304
  %v1345 = vpack.c.bf16 %v1313, %v1312
  %v1346 = vpack.c.bf16 %v1322, %v1321
  %v1347 = vpack.c.bf16 %v1331, %v1330
  %v1348 = vpack.c.bf16 %v1286, %v1284
  %v1349 = vpack.c.bf16 %v1307, %v1306
  %v1350 = vpack.c.bf16 %v1315, %v1314
  %v1351 = vpack.c.bf16 %v1324, %v1323
  %v1352 = vpack.c.bf16 %v1333, %v1332
  %v1353 = vpack.c.bf16 %v1290, %v1288
  %v1354 = vld [vmem:[%s3] sm:$0xf]
  %v1355 = vld [vmem:[%s3 + $0x4] sm:$0xf]
  %v1356 = vld [vmem:[%s3 + $0x8] sm:$0xf]
  %v1357 = vld [vmem:[%s3 + $0xc] sm:$0xf]
  %v1358 = vld [vmem:[%s3 + $0x10] sm:$0xf]
  %v1359 = vld [vmem:[%s3 + $0x14] sm:$0xf]
  %v1360 = vld [vmem:[%s3 + $0x18] sm:$0xf]
  %v1361 = vld [vmem:[%s3 + $0x1c] sm:$0xf]
  %v1362 = vld [vmem:[%s3 + $0x20] sm:$0xf]
  %v1363 = vld [vmem:[%s3 + $0x24] sm:$0xf]
  %v1364 = vld [vmem:[%s3 + $0x28] sm:$0xf]
  %v1365 = vld [vmem:[%s3 + $0x2c] sm:$0xf]
  %v1366 = vld [vmem:[%s3 + $0x30] sm:$0xf]
  %v1367 = vld [vmem:[%s3 + $0x34] sm:$0xf]
  %v1368 = vld [vmem:[%s3 + $0x38] sm:$0xf]
  %v1369 = vld [vmem:[%s3 + $0x3c] sm:$0xf]
  %v1370 = vld [vmem:[%s3 + $0x40] sm:$0xf]
  %v1371 = vld [vmem:[%s3 + $0x44] sm:$0xf]
  %v1372 = vld [vmem:[%s3 + $0x48] sm:$0xf]
  %v1373 = vld [vmem:[%s3 + $0x4c] sm:$0xf]
  %v1374 = vld [vmem:[%s3 + $0x50] sm:$0xf]
  %v1375 = vld [vmem:[%s3 + $0x54] sm:$0xf]
  %v1376 = vld [vmem:[%s3 + $0x58] sm:$0xf]
  %v1377 = vld [vmem:[%s3 + $0x5c] sm:$0xf]
  %v1378 = vld [vmem:[%s3 + $0x60] sm:$0xf]
  %v1379 = vld [vmem:[%s3 + $0x64] sm:$0xf]
  %v1380 = vld [vmem:[%s3 + $0x68] sm:$0xf]
  %v1381 = vld [vmem:[%s3 + $0x6c] sm:$0xf]
  %v1382 = vld [vmem:[%s3 + $0x70] sm:$0xf]
  %v1383 = vld [vmem:[%s3 + $0x74] sm:$0xf]
  %v1384 = vld [vmem:[%s3 + $0x78] sm:$0xf]
  %v1385 = vld [vmem:[%s3 + $0x7c] sm:$0xf]
  %v1386 = vld [vmem:[%s3 + $0x80] sm:$0xf]
  %v1387 = vld [vmem:[%s3 + $0x84] sm:$0xf]
  %v1388 = vld [vmem:[%s3 + $0x88] sm:$0xf]
  %v1389 = vld [vmem:[%s3 + $0x8c] sm:$0xf]
  %v1390 = vld [vmem:[%s3 + $0x90] sm:$0xf]
  %v1391 = vld [vmem:[%s3 + $0x94] sm:$0xf]
  %v1392 = vld [vmem:[%s3 + $0x98] sm:$0xf]
  %v1393 = vld [vmem:[%s3 + $0x9c] sm:$0xf]
  %v1394 = vld [vmem:[%s3 + $0xa0] sm:$0xf]
  %v1395 = vld [vmem:[%s3 + $0xa4] sm:$0xf]
  %v1396 = vld [vmem:[%s3 + $0xa8] sm:$0xf]
  %v1397 = vld [vmem:[%s3 + $0xac] sm:$0xf]
  %v1398 = vld [vmem:[%s3 + $0xb0] sm:$0xf]
  %v1399 = vld [vmem:[%s3 + $0xb4] sm:$0xf]
  %v1400 = vld [vmem:[%s3 + $0xb8] sm:$0xf]
  %v1401 = vld [vmem:[%s3 + $0xbc] sm:$0xf]
  %v1402 = vld [vmem:[%s3 + $0xc0] sm:$0xf]
  %v1403 = vld [vmem:[%s3 + $0xc4] sm:$0xf]
  %v1404 = vld [vmem:[%s3 + $0xc8] sm:$0xf]
  %v1405 = vld [vmem:[%s3 + $0xcc] sm:$0xf]
  %v1406 = vld [vmem:[%s3 + $0xd0] sm:$0xf]
  %v1407 = vld [vmem:[%s3 + $0xd4] sm:$0xf]
  %v1408 = vld [vmem:[%s3 + $0xd8] sm:$0xf]
  %v1409 = vld [vmem:[%s3 + $0xdc] sm:$0xf]
  %v1410 = vld [vmem:[%s3 + $0xe0] sm:$0xf]
  %v1411 = vld [vmem:[%s3 + $0xe4] sm:$0xf]
  %v1412 = vld [vmem:[%s3 + $0xe8] sm:$0xf]
  %v1413 = vld [vmem:[%s3 + $0xec] sm:$0xf]
  %v1414 = vld [vmem:[%s3 + $0xf0] sm:$0xf]
  %v1415 = vld [vmem:[%s3 + $0xf4] sm:$0xf]
  %v1416 = vld [vmem:[%s3 + $0xf8] sm:$0xf]
  %v1417 = vld [vmem:[%s3 + $0xfc] sm:$0xf]
  %v1418 = vld [vmem:[%s3 + $0x100] sm:$0xf]
  %v1419 = vld [vmem:[%s3 + $0x104] sm:$0xf]
  %v1420 = vld [vmem:[%s3 + $0x108] sm:$0xf]
  %v1421 = vld [vmem:[%s3 + $0x10c] sm:$0xf]
  %v1422 = vld [vmem:[%s3 + $0x110] sm:$0xf]
  %v1423 = vld [vmem:[%s3 + $0x114] sm:$0xf]
  %v1424 = vld [vmem:[%s3 + $0x118] sm:$0xf]
  %v1425 = vld [vmem:[%s3 + $0x11c] sm:$0xf]
  %v1426 = vld [vmem:[%s3 + $0x120] sm:$0xf]
  %v1427 = vld [vmem:[%s3 + $0x124] sm:$0xf]
  %v1428 = vld [vmem:[%s3 + $0x128] sm:$0xf]
  %v1504 = vunpack.c.l.b16 %v1354
  %v1505 = vunpack.c.l.b16 %v1355
  %v1506 = vunpack.c.l.b16 %v1356
  %v1507 = vunpack.c.l.b16 %v1357
  %v1508 = vunpack.c.l.b16 %v1358
  %v1509 = vunpack.c.l.b16 %v1359
  %v1510 = vunpack.c.l.b16 %v1360
  %v1511 = vunpack.c.l.b16 %v1361
  %v1512 = vunpack.c.l.b16 %v1362
  %v1513 = vunpack.c.l.b16 %v1363
  %v1514 = vunpack.c.l.b16 %v1364
  %v1515 = vunpack.c.l.b16 %v1365
  %v1516 = vunpack.c.l.b16 %v1366
  %v1517 = vunpack.c.l.b16 %v1367
  %v1518 = vunpack.c.l.b16 %v1368
  %v1519 = vunpack.c.l.b16 %v1369
  %v1520 = vunpack.c.l.b16 %v1370
  %v1521 = vunpack.c.l.b16 %v1371
  %v1522 = vunpack.c.l.b16 %v1372
  %v1523 = vunpack.c.l.b16 %v1373
  %v1524 = vunpack.c.l.b16 %v1374
  %v1525 = vunpack.c.l.b16 %v1375
  %v1526 = vunpack.c.l.b16 %v1376
  %v1527 = vunpack.c.l.b16 %v1377
  %v1528 = vunpack.c.l.b16 %v1378
  %v1529 = vunpack.c.l.b16 %v1379
  %v1530 = vunpack.c.l.b16 %v1380
  %v1531 = vunpack.c.l.b16 %v1381
  %v1532 = vunpack.c.l.b16 %v1382
  %v1533 = vunpack.c.l.b16 %v1383
  %v1534 = vunpack.c.l.b16 %v1384
  %v1535 = vunpack.c.l.b16 %v1385
  %v1536 = vunpack.c.l.b16 %v1386
  %v1537 = vunpack.c.l.b16 %v1387
  %v1538 = vunpack.c.l.b16 %v1388
  %v1539 = vunpack.c.l.b16 %v1389
  %v1540 = vunpack.c.l.b16 %v1390
  %v1541 = vunpack.c.l.b16 %v1391
  %v1542 = vunpack.c.l.b16 %v1392
  %v1543 = vunpack.c.l.b16 %v1393
  %v1544 = vunpack.c.l.b16 %v1394
  %v1545 = vunpack.c.l.b16 %v1395
  %v1546 = vunpack.c.l.b16 %v1396
  %v1547 = vunpack.c.l.b16 %v1397
  %v1548 = vunpack.c.l.b16 %v1398
  %v1549 = vunpack.c.l.b16 %v1399
  %v1550 = vunpack.c.l.b16 %v1400
  %v1551 = vunpack.c.l.b16 %v1401
  %v1552 = vunpack.c.l.b16 %v1402
  %v1553 = vunpack.c.l.b16 %v1403
  %v1554 = vunpack.c.l.b16 %v1404
  %v1555 = vunpack.c.l.b16 %v1405
  %v1556 = vunpack.c.l.b16 %v1406
  %v1557 = vunpack.c.l.b16 %v1407
  %v1558 = vunpack.c.l.b16 %v1408
  %v1559 = vunpack.c.l.b16 %v1409
  %v1560 = vunpack.c.l.b16 %v1410
  %v1561 = vunpack.c.l.b16 %v1411
  %v1562 = vunpack.c.l.b16 %v1412
  %v1563 = vunpack.c.l.b16 %v1413
  %v1564 = vunpack.c.l.b16 %v1414
  %v1565 = vunpack.c.l.b16 %v1415
  %v1566 = vunpack.c.l.b16 %v1416
  %v1567 = vunpack.c.l.b16 %v1417
  %v1568 = vunpack.c.l.b16 %v1418
  %v1569 = vunpack.c.l.b16 %v1419
  %v1570 = vunpack.c.l.b16 %v1420
  %v1571 = vunpack.c.l.b16 %v1421
  %v1572 = vunpack.c.l.b16 %v1422
  %v1573 = vunpack.c.l.b16 %v1423
  %v1574 = vunpack.c.l.b16 %v1424
  %v1575 = vunpack.c.l.b16 %v1425
  %v1576 = vunpack.c.l.b16 %v1426
  %v1577 = vunpack.c.l.b16 %v1427
  %v1578 = vunpack.c.l.b16 %v1428
  %v1579 = vpack.c.b16 %v1505, %v1504
  %v1580 = vpack.c.b16 %v1507, %v1506
  %v1581 = vpack.c.b16 %v1509, %v1508
  %v1582 = vpack.c.b16 %v1511, %v1510
  %v1583 = vpack.c.b16 %v1513, %v1512
  %v1584 = vpack.c.b16 %v1515, %v1514
  %v1585 = vpack.c.b16 %v1517, %v1516
  %v1586 = vpack.c.b16 %v1519, %v1518
  %v1587 = vpack.c.b16 %v1521, %v1520
  %v1588 = vpack.c.b16 %v1523, %v1522
  %v1589 = vpack.c.b16 %v1525, %v1524
  %v1590 = vpack.c.b16 %v1527, %v1526
  %v1591 = vpack.c.b16 %v1529, %v1528
  %v1592 = vpack.c.b16 %v1531, %v1530
  %v1593 = vpack.c.b16 %v1533, %v1532
  %v1594 = vpack.c.b16 %v1535, %v1534
  %v1595 = vpack.c.b16 %v1537, %v1536
  %v1596 = vpack.c.b16 %v1539, %v1538
  %v1597 = vpack.c.b16 %v1541, %v1540
  %v1598 = vpack.c.b16 %v1543, %v1542
  %v1599 = vpack.c.b16 %v1545, %v1544
  %v1600 = vpack.c.b16 %v1547, %v1546
  %v1601 = vpack.c.b16 %v1549, %v1548
  %v1602 = vpack.c.b16 %v1551, %v1550
  %v1603 = vpack.c.b16 %v1553, %v1552
  %v1604 = vpack.c.b16 %v1555, %v1554
  %v1605 = vpack.c.b16 %v1557, %v1556
  %v1606 = vpack.c.b16 %v1559, %v1558
  %v1607 = vpack.c.b16 %v1561, %v1560
  %v1608 = vpack.c.b16 %v1563, %v1562
  %v1609 = vpack.c.b16 %v1565, %v1564
  %v1610 = vpack.c.b16 %v1567, %v1566
  %v1611 = vpack.c.b16 %v1569, %v1568
  %v1612 = vpack.c.b16 %v1571, %v1570
  %v1613 = vpack.c.b16 %v1573, %v1572
  %v1614 = vpack.c.b16 %v1575, %v1574
  %v1615 = vpack.c.b16 %v1577, %v1576
  %v1616 = vpack.c.b16 %v1578, %v1578
  %vm1654 = vcmask 719872
  %v1656 = vsel %vm1654, %v1338, 0
  %v1659 = vsel %vm1654, %v1343, 0
  %v1662 = vsel %vm1654, %v1348, 0
  %v1665 = vsel %vm1654, %v1353, 0
  %vm1667 = vcmask 1043456
  %v1669 = vsel %vm1667, %v1616, 0
  %1671 = vmatpush.bf16.msra.mxu0 %v1586
  %1672 = vmatpush.bf16.msra.mxu0 %v1585
  %1673 = vmatpush.bf16.msra.mxu0 %v1584
  %1674 = vmatpush.bf16.msra.mxu0 %v1583
  %1675 = vmatpush.bf16.msra.mxu0 %v1582
  %1676 = vmatpush.bf16.msra.mxu0 %v1581
  %1677 = vmatpush.bf16.msra.mxu0 %v1580
  %1678 = vmatpush.bf16.msra.mxu0 %v1579
  %1679 = vmatmul.bf16.gmra.mxu0 %v1334
  %v1680 = vpop.f32.mrf.mxu0
  %v1681 = vadd.f32 0.0, %v1680
  %v1682 = vpop.f32.mrf.mxu0
  %v1683 = vadd.f32 0.0, %v1682
  %1684 = vmatmul.bf16.gmra.mxu0 %v1339
  %v1685 = vpop.f32.mrf.mxu0
  %v1686 = vadd.f32 0.0, %v1685
  %v1687 = vpop.f32.mrf.mxu0
  %v1688 = vadd.f32 0.0, %v1687
  %1689 = vmatmul.bf16.gmra.mxu0 %v1344
  %v1690 = vpop.f32.mrf.mxu0
  %v1691 = vadd.f32 0.0, %v1690
  %v1692 = vpop.f32.mrf.mxu0
  %v1693 = vadd.f32 0.0, %v1692
  %1694 = vmatmul.bf16.gmra.mxu0 %v1349
  %v1695 = vpop.f32.mrf.mxu0
  %v1696 = vadd.f32 0.0, %v1695
  %v1697 = vpop.f32.mrf.mxu0
  %v1698 = vadd.f32 0.0, %v1697
  %1699 = vdwg.mxu0
  %1700 = vmatpush.bf16.msra.mxu0 %v1594
  %1701 = vmatpush.bf16.msra.mxu0 %v1593
  %1702 = vmatpush.bf16.msra.mxu0 %v1592
  %1703 = vmatpush.bf16.msra.mxu0 %v1591
  %1704 = vmatpush.bf16.msra.mxu0 %v1590
  %1705 = vmatpush.bf16.msra.mxu0 %v1589
  %1706 = vmatpush.bf16.msra.mxu0 %v1588
  %1707 = vmatpush.bf16.msra.mxu0 %v1587
  %1708 = vmatmul.bf16.gmra.mxu0 %v1335
  %v1709 = vpop.f32.mrf.mxu0
  %v1710 = vadd.f32 %v1681, %v1709
  %v1711 = vpop.f32.mrf.mxu0
  %v1712 = vadd.f32 %v1683, %v1711
  %1713 = vmatmul.bf16.gmra.mxu0 %v1340
  %v1714 = vpop.f32.mrf.mxu0
  %v1715 = vadd.f32 %v1686, %v1714
  %v1716 = vpop.f32.mrf.mxu0
  %v1717 = vadd.f32 %v1688, %v1716
  %1718 = vmatmul.bf16.gmra.mxu0 %v1345
  %v1719 = vpop.f32.mrf.mxu0
  %v1720 = vadd.f32 %v1691, %v1719
  %v1721 = vpop.f32.mrf.mxu0
  %v1722 = vadd.f32 %v1693, %v1721
  %1723 = vmatmul.bf16.gmra.mxu0 %v1350
  %v1724 = vpop.f32.mrf.mxu0
  %v1725 = vadd.f32 %v1696, %v1724
  %v1726 = vpop.f32.mrf.mxu0
  %v1727 = vadd.f32 %v1698, %v1726
  %1728 = vdwg.mxu0
  %1729 = vmatpush.bf16.msra.mxu0 %v1602
  %1730 = vmatpush.bf16.msra.mxu0 %v1601
  %1731 = vmatpush.bf16.msra.mxu0 %v1600
  %1732 = vmatpush.bf16.msra.mxu0 %v1599
  %1733 = vmatpush.bf16.msra.mxu0 %v1598
  %1734 = vmatpush.bf16.msra.mxu0 %v1597
  %1735 = vmatpush.bf16.msra.mxu0 %v1596
  %1736 = vmatpush.bf16.msra.mxu0 %v1595
  %1737 = vmatmul.bf16.gmra.mxu0 %v1336
  %v1738 = vpop.f32.mrf.mxu0
  %v1739 = vadd.f32 %v1710, %v1738
  %v1740 = vpop.f32.mrf.mxu0
  %v1741 = vadd.f32 %v1712, %v1740
  %1742 = vmatmul.bf16.gmra.mxu0 %v1341
  %v1743 = vpop.f32.mrf.mxu0
  %v1744 = vadd.f32 %v1715, %v1743
  %v1745 = vpop.f32.mrf.mxu0
  %v1746 = vadd.f32 %v1717, %v1745
  %1747 = vmatmul.bf16.gmra.mxu0 %v1346
  %v1748 = vpop.f32.mrf.mxu0
  %v1749 = vadd.f32 %v1720, %v1748
  %v1750 = vpop.f32.mrf.mxu0
  %v1751 = vadd.f32 %v1722, %v1750
  %1752 = vmatmul.bf16.gmra.mxu0 %v1351
  %v1753 = vpop.f32.mrf.mxu0
  %v1754 = vadd.f32 %v1725, %v1753
  %v1755 = vpop.f32.mrf.mxu0
  %v1756 = vadd.f32 %v1727, %v1755
  %1757 = vdwg.mxu0
  %1758 = vmatpush.bf16.msra.mxu0 %v1610
  %1759 = vmatpush.bf16.msra.mxu0 %v1609
  %1760 = vmatpush.bf16.msra.mxu0 %v1608
  %1761 = vmatpush.bf16.msra.mxu0 %v1607
  %1762 = vmatpush.bf16.msra.mxu0 %v1606
  %1763 = vmatpush.bf16.msra.mxu0 %v1605
  %1764 = vmatpush.bf16.msra.mxu0 %v1604
  %1765 = vmatpush.bf16.msra.mxu0 %v1603
  %1766 = vmatmul.bf16.gmra.mxu0 %v1337
  %v1767 = vpop.f32.mrf.mxu0
  %v1768 = vadd.f32 %v1739, %v1767
  %v1769 = vpop.f32.mrf.mxu0
  %v1770 = vadd.f32 %v1741, %v1769
  %1771 = vmatmul.bf16.gmra.mxu0 %v1342
  %v1772 = vpop.f32.mrf.mxu0
  %v1773 = vadd.f32 %v1744, %v1772
  %v1774 = vpop.f32.mrf.mxu0
  %v1775 = vadd.f32 %v1746, %v1774
  %1776 = vmatmul.bf16.gmra.mxu0 %v1347
  %v1777 = vpop.f32.mrf.mxu0
  %v1778 = vadd.f32 %v1749, %v1777
  %v1779 = vpop.f32.mrf.mxu0
  %v1780 = vadd.f32 %v1751, %v1779
  %1781 = vmatmul.bf16.gmra.mxu0 %v1352
  %v1782 = vpop.f32.mrf.mxu0
  %v1783 = vadd.f32 %v1754, %v1782
  %v1784 = vpop.f32.mrf.mxu0
  %v1785 = vadd.f32 %v1756, %v1784
  %1786 = vdwg.mxu0
  %1787 = vmatpush.bf16.msra.mxu0 0
  %1788 = vmatpush.bf16.msra.mxu0 0
  %1789 = vmatpush.bf16.msra.mxu0 %v1669
  %1790 = vmatpush.bf16.msra.mxu0 %v1615
  %1791 = vmatpush.bf16.msra.mxu0 %v1614
  %1792 = vmatpush.bf16.msra.mxu0 %v1613
  %1793 = vmatpush.bf16.msra.mxu0 %v1612
  %1794 = vmatpush.bf16.msra.mxu0 %v1611
  %1795 = vmatmul.bf16.gmra.mxu0 %v1656
  %v1796 = vpop.f32.mrf.mxu0
  %v1797 = vadd.f32 %v1768, %v1796
  %v1798 = vpop.f32.mrf.mxu0
  %v1799 = vadd.f32 %v1770, %v1798
  %1800 = vmatmul.bf16.gmra.mxu0 %v1659
  %v1801 = vpop.f32.mrf.mxu0
  %v1802 = vadd.f32 %v1773, %v1801
  %v1803 = vpop.f32.mrf.mxu0
  %v1804 = vadd.f32 %v1775, %v1803
  %1805 = vmatmul.bf16.gmra.mxu0 %v1662
  %v1806 = vpop.f32.mrf.mxu0
  %v1807 = vadd.f32 %v1778, %v1806
  %v1808 = vpop.f32.mrf.mxu0
  %v1809 = vadd.f32 %v1780, %v1808
  %1810 = vmatmul.bf16.gmra.mxu0 %v1665
  %v1811 = vpop.f32.mrf.mxu0
  %v1812 = vadd.f32 %v1783, %v1811
  %v1813 = vpop.f32.mrf.mxu0
  %v1814 = vadd.f32 %v1785, %v1813
  %1815 = vdwg.mxu0
  %s1816 = scalar_lea.vmem %s3, 300
  %v1817 = vld [vmem:[%s1816] sm:$0xf]
  %v1818 = vld [vmem:[%s1816 + $0x4] sm:$0xf]
  %v1819 = vld [vmem:[%s1816 + $0x8] sm:$0xf]
  %v1820 = vld [vmem:[%s1816 + $0xc] sm:$0xf]
  %v1821 = vld [vmem:[%s1816 + $0x10] sm:$0xf]
  %v1822 = vld [vmem:[%s1816 + $0x14] sm:$0xf]
  %v1823 = vld [vmem:[%s1816 + $0x18] sm:$0xf]
  %v1824 = vld [vmem:[%s1816 + $0x1c] sm:$0xf]
  %v1825 = vld [vmem:[%s1816 + $0x20] sm:$0xf]
  %v1826 = vld [vmem:[%s1816 + $0x24] sm:$0xf]
  %v1827 = vld [vmem:[%s1816 + $0x28] sm:$0xf]
  %v1828 = vld [vmem:[%s1816 + $0x2c] sm:$0xf]
  %v1829 = vld [vmem:[%s1816 + $0x30] sm:$0xf]
  %v1830 = vld [vmem:[%s1816 + $0x34] sm:$0xf]
  %v1831 = vld [vmem:[%s1816 + $0x38] sm:$0xf]
  %v1832 = vld [vmem:[%s1816 + $0x3c] sm:$0xf]
  %v1833 = vld [vmem:[%s1816 + $0x40] sm:$0xf]
  %v1834 = vld [vmem:[%s1816 + $0x44] sm:$0xf]
  %v1835 = vld [vmem:[%s1816 + $0x48] sm:$0xf]
  %v1836 = vld [vmem:[%s1816 + $0x4c] sm:$0xf]
  %v1837 = vld [vmem:[%s1816 + $0x50] sm:$0xf]
  %v1838 = vld [vmem:[%s1816 + $0x54] sm:$0xf]
  %v1839 = vld [vmem:[%s1816 + $0x58] sm:$0xf]
  %v1840 = vld [vmem:[%s1816 + $0x5c] sm:$0xf]
  %v1841 = vld [vmem:[%s1816 + $0x60] sm:$0xf]
  %v1842 = vld [vmem:[%s1816 + $0x64] sm:$0xf]
  %v1843 = vld [vmem:[%s1816 + $0x68] sm:$0xf]
  %v1844 = vld [vmem:[%s1816 + $0x6c] sm:$0xf]
  %v1845 = vld [vmem:[%s1816 + $0x70] sm:$0xf]
  %v1846 = vld [vmem:[%s1816 + $0x74] sm:$0xf]
  %v1847 = vld [vmem:[%s1816 + $0x78] sm:$0xf]
  %v1848 = vld [vmem:[%s1816 + $0x7c] sm:$0xf]
  %v1849 = vld [vmem:[%s1816 + $0x80] sm:$0xf]
  %v1850 = vld [vmem:[%s1816 + $0x84] sm:$0xf]
  %v1851 = vld [vmem:[%s1816 + $0x88] sm:$0xf]
  %v1852 = vld [vmem:[%s1816 + $0x8c] sm:$0xf]
  %v1853 = vld [vmem:[%s1816 + $0x90] sm:$0xf]
  %v1854 = vld [vmem:[%s1816 + $0x94] sm:$0xf]
  %v1855 = vld [vmem:[%s1816 + $0x98] sm:$0xf]
  %v1856 = vld [vmem:[%s1816 + $0x9c] sm:$0xf]
  %v1857 = vld [vmem:[%s1816 + $0xa0] sm:$0xf]
  %v1858 = vld [vmem:[%s1816 + $0xa4] sm:$0xf]
  %v1859 = vld [vmem:[%s1816 + $0xa8] sm:$0xf]
  %v1860 = vld [vmem:[%s1816 + $0xac] sm:$0xf]
  %v1861 = vld [vmem:[%s1816 + $0xb0] sm:$0xf]
  %v1862 = vld [vmem:[%s1816 + $0xb4] sm:$0xf]
  %v1863 = vld [vmem:[%s1816 + $0xb8] sm:$0xf]
  %v1864 = vld [vmem:[%s1816 + $0xbc] sm:$0xf]
  %v1865 = vld [vmem:[%s1816 + $0xc0] sm:$0xf]
  %v1866 = vld [vmem:[%s1816 + $0xc4] sm:$0xf]
  %v1867 = vld [vmem:[%s1816 + $0xc8] sm:$0xf]
  %v1868 = vld [vmem:[%s1816 + $0xcc] sm:$0xf]
  %v1869 = vld [vmem:[%s1816 + $0xd0] sm:$0xf]
  %v1870 = vld [vmem:[%s1816 + $0xd4] sm:$0xf]
  %v1871 = vld [vmem:[%s1816 + $0xd8] sm:$0xf]
  %v1872 = vld [vmem:[%s1816 + $0xdc] sm:$0xf]
  %v1873 = vld [vmem:[%s1816 + $0xe0] sm:$0xf]
  %v1874 = vld [vmem:[%s1816 + $0xe4] sm:$0xf]
  %v1875 = vld [vmem:[%s1816 + $0xe8] sm:$0xf]
  %v1876 = vld [vmem:[%s1816 + $0xec] sm:$0xf]
  %v1877 = vld [vmem:[%s1816 + $0xf0] sm:$0xf]
  %v1878 = vld [vmem:[%s1816 + $0xf4] sm:$0xf]
  %v1879 = vld [vmem:[%s1816 + $0xf8] sm:$0xf]
  %v1880 = vld [vmem:[%s1816 + $0xfc] sm:$0xf]
  %v1881 = vld [vmem:[%s1816 + $0x100] sm:$0xf]
  %v1882 = vld [vmem:[%s1816 + $0x104] sm:$0xf]
  %v1883 = vld [vmem:[%s1816 + $0x108] sm:$0xf]
  %v1884 = vld [vmem:[%s1816 + $0x10c] sm:$0xf]
  %v1885 = vld [vmem:[%s1816 + $0x110] sm:$0xf]
  %v1886 = vld [vmem:[%s1816 + $0x114] sm:$0xf]
  %v1887 = vld [vmem:[%s1816 + $0x118] sm:$0xf]
  %v1888 = vld [vmem:[%s1816 + $0x11c] sm:$0xf]
  %v1889 = vld [vmem:[%s1816 + $0x120] sm:$0xf]
  %v1890 = vld [vmem:[%s1816 + $0x124] sm:$0xf]
  %v1891 = vld [vmem:[%s1816 + $0x128] sm:$0xf]
  %v1967 = vunpack.c.l.b16 %v1817
  %v1968 = vunpack.c.l.b16 %v1818
  %v1969 = vunpack.c.l.b16 %v1819
  %v1970 = vunpack.c.l.b16 %v1820
  %v1971 = vunpack.c.l.b16 %v1821
  %v1972 = vunpack.c.l.b16 %v1822
  %v1973 = vunpack.c.l.b16 %v1823
  %v1974 = vunpack.c.l.b16 %v1824
  %v1975 = vunpack.c.l.b16 %v1825
  %v1976 = vunpack.c.l.b16 %v1826
  %v1977 = vunpack.c.l.b16 %v1827
  %v1978 = vunpack.c.l.b16 %v1828
  %v1979 = vunpack.c.l.b16 %v1829
  %v1980 = vunpack.c.l.b16 %v1830
  %v1981 = vunpack.c.l.b16 %v1831
  %v1982 = vunpack.c.l.b16 %v1832
  %v1983 = vunpack.c.l.b16 %v1833
  %v1984 = vunpack.c.l.b16 %v1834
  %v1985 = vunpack.c.l.b16 %v1835
  %v1986 = vunpack.c.l.b16 %v1836
  %v1987 = vunpack.c.l.b16 %v1837
  %v1988 = vunpack.c.l.b16 %v1838
  %v1989 = vunpack.c.l.b16 %v1839
  %v1990 = vunpack.c.l.b16 %v1840
  %v1991 = vunpack.c.l.b16 %v1841
  %v1992 = vunpack.c.l.b16 %v1842
  %v1993 = vunpack.c.l.b16 %v1843
  %v1994 = vunpack.c.l.b16 %v1844
  %v1995 = vunpack.c.l.b16 %v1845
  %v1996 = vunpack.c.l.b16 %v1846
  %v1997 = vunpack.c.l.b16 %v1847
  %v1998 = vunpack.c.l.b16 %v1848
  %v1999 = vunpack.c.l.b16 %v1849
  %v2000 = vunpack.c.l.b16 %v1850
  %v2001 = vunpack.c.l.b16 %v1851
  %v2002 = vunpack.c.l.b16 %v1852
  %v2003 = vunpack.c.l.b16 %v1853
  %v2004 = vunpack.c.l.b16 %v1854
  %v2005 = vunpack.c.l.b16 %v1855
  %v2006 = vunpack.c.l.b16 %v1856
  %v2007 = vunpack.c.l.b16 %v1857
  %v2008 = vunpack.c.l.b16 %v1858
  %v2009 = vunpack.c.l.b16 %v1859
  %v2010 = vunpack.c.l.b16 %v1860
  %v2011 = vunpack.c.l.b16 %v1861
  %v2012 = vunpack.c.l.b16 %v1862
  %v2013 = vunpack.c.l.b16 %v1863
  %v2014 = vunpack.c.l.b16 %v1864
  %v2015 = vunpack.c.l.b16 %v1865
  %v2016 = vunpack.c.l.b16 %v1866
  %v2017 = vunpack.c.l.b16 %v1867
  %v2018 = vunpack.c.l.b16 %v1868
  %v2019 = vunpack.c.l.b16 %v1869
  %v2020 = vunpack.c.l.b16 %v1870
  %v2021 = vunpack.c.l.b16 %v1871
  %v2022 = vunpack.c.l.b16 %v1872
  %v2023 = vunpack.c.l.b16 %v1873
  %v2024 = vunpack.c.l.b16 %v1874
  %v2025 = vunpack.c.l.b16 %v1875
  %v2026 = vunpack.c.l.b16 %v1876
  %v2027 = vunpack.c.l.b16 %v1877
  %v2028 = vunpack.c.l.b16 %v1878
  %v2029 = vunpack.c.l.b16 %v1879
  %v2030 = vunpack.c.l.b16 %v1880
  %v2031 = vunpack.c.l.b16 %v1881
  %v2032 = vunpack.c.l.b16 %v1882
  %v2033 = vunpack.c.l.b16 %v1883
  %v2034 = vunpack.c.l.b16 %v1884
  %v2035 = vunpack.c.l.b16 %v1885
  %v2036 = vunpack.c.l.b16 %v1886
  %v2037 = vunpack.c.l.b16 %v1887
  %v2038 = vunpack.c.l.b16 %v1888
  %v2039 = vunpack.c.l.b16 %v1889
  %v2040 = vunpack.c.l.b16 %v1890
  %v2041 = vunpack.c.l.b16 %v1891
  %v2042 = vpack.c.b16 %v1968, %v1967
  %v2043 = vpack.c.b16 %v1970, %v1969
  %v2044 = vpack.c.b16 %v1972, %v1971
  %v2045 = vpack.c.b16 %v1974, %v1973
  %v2046 = vpack.c.b16 %v1976, %v1975
  %v2047 = vpack.c.b16 %v1978, %v1977
  %v2048 = vpack.c.b16 %v1980, %v1979
  %v2049 = vpack.c.b16 %v1982, %v1981
  %v2050 = vpack.c.b16 %v1984, %v1983
  %v2051 = vpack.c.b16 %v1986, %v1985
  %v2052 = vpack.c.b16 %v1988, %v1987
  %v2053 = vpack.c.b16 %v1990, %v1989
  %v2054 = vpack.c.b16 %v1992, %v1991
  %v2055 = vpack.c.b16 %v1994, %v1993
  %v2056 = vpack.c.b16 %v1996, %v1995
  %v2057 = vpack.c.b16 %v1998, %v1997
  %v2058 = vpack.c.b16 %v2000, %v1999
  %v2059 = vpack.c.b16 %v2002, %v2001
  %v2060 = vpack.c.b16 %v2004, %v2003
  %v2061 = vpack.c.b16 %v2006, %v2005
  %v2062 = vpack.c.b16 %v2008, %v2007
  %v2063 = vpack.c.b16 %v2010, %v2009
  %v2064 = vpack.c.b16 %v2012, %v2011
  %v2065 = vpack.c.b16 %v2014, %v2013
  %v2066 = vpack.c.b16 %v2016, %v2015
  %v2067 = vpack.c.b16 %v2018, %v2017
  %v2068 = vpack.c.b16 %v2020, %v2019
  %v2069 = vpack.c.b16 %v2022, %v2021
  %v2070 = vpack.c.b16 %v2024, %v2023
  %v2071 = vpack.c.b16 %v2026, %v2025
  %v2072 = vpack.c.b16 %v2028, %v2027
  %v2073 = vpack.c.b16 %v2030, %v2029
  %v2074 = vpack.c.b16 %v2032, %v2031
  %v2075 = vpack.c.b16 %v2034, %v2033
  %v2076 = vpack.c.b16 %v2036, %v2035
  %v2077 = vpack.c.b16 %v2038, %v2037
  %v2078 = vpack.c.b16 %v2040, %v2039
  %v2079 = vpack.c.b16 %v2041, %v2041
  %v2118 = vsel %vm1667, %v2079, 0
  %2120 = vmatpush.bf16.msra.mxu0 %v2049
  %2121 = vmatpush.bf16.msra.mxu0 %v2048
  %2122 = vmatpush.bf16.msra.mxu0 %v2047
  %2123 = vmatpush.bf16.msra.mxu0 %v2046
  %2124 = vmatpush.bf16.msra.mxu0 %v2045
  %2125 = vmatpush.bf16.msra.mxu0 %v2044
  %2126 = vmatpush.bf16.msra.mxu0 %v2043
  %2127 = vmatpush.bf16.msra.mxu0 %v2042
  %2128 = vmatmul.bf16.gmra.mxu0 %v1334
  %v2129 = vpop.f32.mrf.mxu0
  %v2130 = vadd.f32 0.0, %v2129
  %v2131 = vpop.f32.mrf.mxu0
  %v2132 = vadd.f32 0.0, %v2131
  %2133 = vmatmul.bf16.gmra.mxu0 %v1339
  %v2134 = vpop.f32.mrf.mxu0
  %v2135 = vadd.f32 0.0, %v2134
  %v2136 = vpop.f32.mrf.mxu0
  %v2137 = vadd.f32 0.0, %v2136
  %2138 = vmatmul.bf16.gmra.mxu0 %v1344
  %v2139 = vpop.f32.mrf.mxu0
  %v2140 = vadd.f32 0.0, %v2139
  %v2141 = vpop.f32.mrf.mxu0
  %v2142 = vadd.f32 0.0, %v2141
  %2143 = vmatmul.bf16.gmra.mxu0 %v1349
  %v2144 = vpop.f32.mrf.mxu0
  %v2145 = vadd.f32 0.0, %v2144
  %v2146 = vpop.f32.mrf.mxu0
  %v2147 = vadd.f32 0.0, %v2146
  %2148 = vdwg.mxu0
  %2149 = vmatpush.bf16.msra.mxu0 %v2057
  %2150 = vmatpush.bf16.msra.mxu0 %v2056
  %2151 = vmatpush.bf16.msra.mxu0 %v2055
  %2152 = vmatpush.bf16.msra.mxu0 %v2054
  %2153 = vmatpush.bf16.msra.mxu0 %v2053
  %2154 = vmatpush.bf16.msra.mxu0 %v2052
  %2155 = vmatpush.bf16.msra.mxu0 %v2051
  %2156 = vmatpush.bf16.msra.mxu0 %v2050
  %2157 = vmatmul.bf16.gmra.mxu0 %v1335
  %v2158 = vpop.f32.mrf.mxu0
  %v2159 = vadd.f32 %v2130, %v2158
  %v2160 = vpop.f32.mrf.mxu0
  %v2161 = vadd.f32 %v2132, %v2160
  %2162 = vmatmul.bf16.gmra.mxu0 %v1340
  %v2163 = vpop.f32.mrf.mxu0
  %v2164 = vadd.f32 %v2135, %v2163
  %v2165 = vpop.f32.mrf.mxu0
  %v2166 = vadd.f32 %v2137, %v2165
  %2167 = vmatmul.bf16.gmra.mxu0 %v1345
  %v2168 = vpop.f32.mrf.mxu0
  %v2169 = vadd.f32 %v2140, %v2168
  %v2170 = vpop.f32.mrf.mxu0
  %v2171 = vadd.f32 %v2142, %v2170
  %2172 = vmatmul.bf16.gmra.mxu0 %v1350
  %v2173 = vpop.f32.mrf.mxu0
  %v2174 = vadd.f32 %v2145, %v2173
  %v2175 = vpop.f32.mrf.mxu0
  %v2176 = vadd.f32 %v2147, %v2175
  %2177 = vdwg.mxu0
  %2178 = vmatpush.bf16.msra.mxu0 %v2065
  %2179 = vmatpush.bf16.msra.mxu0 %v2064
  %2180 = vmatpush.bf16.msra.mxu0 %v2063
  %2181 = vmatpush.bf16.msra.mxu0 %v2062
  %2182 = vmatpush.bf16.msra.mxu0 %v2061
  %2183 = vmatpush.bf16.msra.mxu0 %v2060
  %2184 = vmatpush.bf16.msra.mxu0 %v2059
  %2185 = vmatpush.bf16.msra.mxu0 %v2058
  %2186 = vmatmul.bf16.gmra.mxu0 %v1336
  %v2187 = vpop.f32.mrf.mxu0
  %v2188 = vadd.f32 %v2159, %v2187
  %v2189 = vpop.f32.mrf.mxu0
  %v2190 = vadd.f32 %v2161, %v2189
  %2191 = vmatmul.bf16.gmra.mxu0 %v1341
  %v2192 = vpop.f32.mrf.mxu0
  %v2193 = vadd.f32 %v2164, %v2192
  %v2194 = vpop.f32.mrf.mxu0
  %v2195 = vadd.f32 %v2166, %v2194
  %2196 = vmatmul.bf16.gmra.mxu0 %v1346
  %v2197 = vpop.f32.mrf.mxu0
  %v2198 = vadd.f32 %v2169, %v2197
  %v2199 = vpop.f32.mrf.mxu0
  %v2200 = vadd.f32 %v2171, %v2199
  %2201 = vmatmul.bf16.gmra.mxu0 %v1351
  %v2202 = vpop.f32.mrf.mxu0
  %v2203 = vadd.f32 %v2174, %v2202
  %v2204 = vpop.f32.mrf.mxu0
  %v2205 = vadd.f32 %v2176, %v2204
  %2206 = vdwg.mxu0
  %2207 = vmatpush.bf16.msra.mxu0 %v2073
  %2208 = vmatpush.bf16.msra.mxu0 %v2072
  %2209 = vmatpush.bf16.msra.mxu0 %v2071
  %2210 = vmatpush.bf16.msra.mxu0 %v2070
  %2211 = vmatpush.bf16.msra.mxu0 %v2069
  %2212 = vmatpush.bf16.msra.mxu0 %v2068
  %2213 = vmatpush.bf16.msra.mxu0 %v2067
  %2214 = vmatpush.bf16.msra.mxu0 %v2066
  %2215 = vmatmul.bf16.gmra.mxu0 %v1337
  %v2216 = vpop.f32.mrf.mxu0
  %v2217 = vadd.f32 %v2188, %v2216
  %v2218 = vpop.f32.mrf.mxu0
  %v2219 = vadd.f32 %v2190, %v2218
  %2220 = vmatmul.bf16.gmra.mxu0 %v1342
  %v2221 = vpop.f32.mrf.mxu0
  %v2222 = vadd.f32 %v2193, %v2221
  %v2223 = vpop.f32.mrf.mxu0
  %v2224 = vadd.f32 %v2195, %v2223
  %2225 = vmatmul.bf16.gmra.mxu0 %v1347
  %v2226 = vpop.f32.mrf.mxu0
  %v2227 = vadd.f32 %v2198, %v2226
  %v2228 = vpop.f32.mrf.mxu0
  %v2229 = vadd.f32 %v2200, %v2228
  %2230 = vmatmul.bf16.gmra.mxu0 %v1352
  %v2231 = vpop.f32.mrf.mxu0
  %v2232 = vadd.f32 %v2203, %v2231
  %v2233 = vpop.f32.mrf.mxu0
  %v2234 = vadd.f32 %v2205, %v2233
  %2235 = vdwg.mxu0
  %2236 = vmatpush.bf16.msra.mxu0 0
  %2237 = vmatpush.bf16.msra.mxu0 0
  %2238 = vmatpush.bf16.msra.mxu0 %v2118
  %2239 = vmatpush.bf16.msra.mxu0 %v2078
  %2240 = vmatpush.bf16.msra.mxu0 %v2077
  %2241 = vmatpush.bf16.msra.mxu0 %v2076
  %2242 = vmatpush.bf16.msra.mxu0 %v2075
  %2243 = vmatpush.bf16.msra.mxu0 %v2074
  %2244 = vmatmul.bf16.gmra.mxu0 %v1656
  %v2245 = vpop.f32.mrf.mxu0
  %v2246 = vadd.f32 %v2217, %v2245
  %v2247 = vpop.f32.mrf.mxu0
  %v2248 = vadd.f32 %v2219, %v2247
  %2249 = vmatmul.bf16.gmra.mxu0 %v1659
  %v2250 = vpop.f32.mrf.mxu0
  %v2251 = vadd.f32 %v2222, %v2250
  %v2252 = vpop.f32.mrf.mxu0
  %v2253 = vadd.f32 %v2224, %v2252
  %2254 = vmatmul.bf16.gmra.mxu0 %v1662
  %v2255 = vpop.f32.mrf.mxu0
  %v2256 = vadd.f32 %v2227, %v2255
  %v2257 = vpop.f32.mrf.mxu0
  %v2258 = vadd.f32 %v2229, %v2257
  %2259 = vmatmul.bf16.gmra.mxu0 %v1665
  %v2260 = vpop.f32.mrf.mxu0
  %v2261 = vadd.f32 %v2232, %v2260
  %v2262 = vpop.f32.mrf.mxu0
  %v2263 = vadd.f32 %v2234, %v2262
  %2264 = vdwg.mxu0
  %v2265 = vmax.f32 %v1797, %v2246
  %v2266 = vmax.f32 %v1799, %v2248
  %v2267 = vmax.f32 %v1802, %v2251
  %v2268 = vmax.f32 %v1804, %v2253
  %v2269 = vmax.f32 %v1807, %v2256
  %v2270 = vmax.f32 %v1809, %v2258
  %v2271 = vmax.f32 %v1812, %v2261
  %v2272 = vmax.f32 %v1814, %v2263
  %v2273 = vld [vmem:[%s4] sm:$0x1]
  %v2274 = vmax.f32 %v2265, %v2266
  %v2276 = vperm.slane %v2273, 0
  %v2278 = vadd.f32 %v2274, %v2276
  %v2279 = vmax.f32 %v2278, 0.0
  %v2280 = vmax.f32 %v2267, %v2268
  %v2281 = vadd.f32 %v2280, %v2276
  %v2282 = vmax.f32 %v2281, 0.0
  %v2283 = vmax.f32 %v2269, %v2270
  %v2284 = vadd.f32 %v2283, %v2276
  %v2285 = vmax.f32 %v2284, 0.0
  %v2286 = vmax.f32 %v2271, %v2272
  %v2287 = vadd.f32 %v2286, %v2276
  %v2288 = vmax.f32 %v2287, 0.0
  %2290 = vrot.lane.b32.xlu0 %v2282, 80
  %v2291 = vpop.permute.xlu0 %2290
  %2294 = vrot.lane.b32.xlu0 %v2285, 32
  %v2295 = vpop.permute.xlu0 %2294
  %2298 = vrot.lane.b32.xlu0 %v2288, 112
  %v2299 = vpop.permute.xlu0 %2298
  %vm2301 = vcmask 654336
  %v2302 = vsel %vm2301, %v2279, %v2291
  %vm2303 = vcmask 261120
  %v2304 = vsel %vm2303, %v2291, %v2295
  %v2305 = vsel %vm640, %v2304, %v2299
  %v2306 = vpack.c.bf16 %v2302, %v2302
  %v2307 = vpack.c.bf16 %v2305, %v2305
  %v2308 = vpack.c.bf16 %v2299, %v2299
  %v2309 = vld [vmem:[%s5] sm:$0xf]
  %v2310 = vld [vmem:[%s5 + $0x4] sm:$0xf]
  %v2311 = vld [vmem:[%s5 + $0x8] sm:$0xf]
  %v2312 = vld [vmem:[%s5 + $0xc] sm:$0xf]
  %v2313 = vld [vmem:[%s5 + $0x10] sm:$0xf]
  %v2314 = vld [vmem:[%s5 + $0x14] sm:$0xf]
  %v2315 = vld [vmem:[%s5 + $0x18] sm:$0xf]
  %v2316 = vld [vmem:[%s5 + $0x1c] sm:$0xf]
  %v2317 = vld [vmem:[%s5 + $0x20] sm:$0xf]
  %v2318 = vld [vmem:[%s5 + $0x24] sm:$0xf]
  %v2319 = vld [vmem:[%s5 + $0x28] sm:$0xf]
  %v2320 = vld [vmem:[%s5 + $0x2c] sm:$0xf]
  %v2321 = vld [vmem:[%s5 + $0x30] sm:$0xf]
  %v2322 = vld [vmem:[%s5 + $0x34] sm:$0xf]
  %v2323 = vld [vmem:[%s5 + $0x38] sm:$0xf]
  %v2324 = vld [vmem:[%s5 + $0x3c] sm:$0xf]
  %v2325 = vld [vmem:[%s5 + $0x40] sm:$0xf]
  %v2326 = vld [vmem:[%s5 + $0x44] sm:$0xf]
  %v2327 = vld [vmem:[%s5 + $0x48] sm:$0xf]
  %v2328 = vld [vmem:[%s5 + $0x4c] sm:$0xf]
  %v2329 = vld [vmem:[%s5 + $0x50] sm:$0xf]
  %v2330 = vld [vmem:[%s5 + $0x54] sm:$0xf]
  %v2331 = vld [vmem:[%s5 + $0x58] sm:$0xf]
  %v2332 = vld [vmem:[%s5 + $0x5c] sm:$0xf]
  %v2333 = vld [vmem:[%s5 + $0x60] sm:$0xf]
  %v2334 = vld [vmem:[%s5 + $0x64] sm:$0xf]
  %v2335 = vld [vmem:[%s5 + $0x68] sm:$0xf]
  %v2336 = vld [vmem:[%s5 + $0x6c] sm:$0xf]
  %v2337 = vld [vmem:[%s5 + $0x70] sm:$0xf]
  %v2338 = vld [vmem:[%s5 + $0x74] sm:$0xf]
  %v2339 = vld [vmem:[%s5 + $0x78] sm:$0xf]
  %v2340 = vld [vmem:[%s5 + $0x7c] sm:$0xf]
  %v2341 = vld [vmem:[%s5 + $0x80] sm:$0xf]
  %v2342 = vld [vmem:[%s5 + $0x84] sm:$0xf]
  %v2343 = vld [vmem:[%s5 + $0x88] sm:$0xf]
  %v2344 = vld [vmem:[%s5 + $0x8c] sm:$0xf]
  %v2345 = vld [vmem:[%s5 + $0x90] sm:$0xf]
  %v2346 = vld [vmem:[%s5 + $0x94] sm:$0xf]
  %v2347 = vld [vmem:[%s5 + $0x98] sm:$0xf]
  %v2348 = vld [vmem:[%s5 + $0x9c] sm:$0xf]
  %v2349 = vld [vmem:[%s6] sm:$0x1]
  %v2351 = vperm.slane %v2349, 0
  %v2393 = vunpack.c.l.b16 %v2309
  %v2394 = vunpack.c.l.b16 %v2310
  %v2395 = vunpack.c.l.b16 %v2311
  %v2396 = vunpack.c.l.b16 %v2312
  %v2397 = vunpack.c.l.b16 %v2313
  %v2398 = vunpack.c.l.b16 %v2314
  %v2399 = vunpack.c.l.b16 %v2315
  %v2400 = vunpack.c.l.b16 %v2316
  %v2401 = vunpack.c.l.b16 %v2317
  %v2402 = vunpack.c.l.b16 %v2318
  %v2403 = vunpack.c.l.b16 %v2319
  %v2404 = vunpack.c.l.b16 %v2320
  %v2405 = vunpack.c.l.b16 %v2321
  %v2406 = vunpack.c.l.b16 %v2322
  %v2407 = vunpack.c.l.b16 %v2323
  %v2408 = vunpack.c.l.b16 %v2324
  %v2409 = vunpack.c.l.b16 %v2325
  %v2410 = vunpack.c.l.b16 %v2326
  %v2411 = vunpack.c.l.b16 %v2327
  %v2412 = vunpack.c.l.b16 %v2328
  %v2413 = vunpack.c.l.b16 %v2329
  %v2414 = vunpack.c.l.b16 %v2330
  %v2415 = vunpack.c.l.b16 %v2331
  %v2416 = vunpack.c.l.b16 %v2332
  %v2417 = vunpack.c.l.b16 %v2333
  %v2418 = vunpack.c.l.b16 %v2334
  %v2419 = vunpack.c.l.b16 %v2335
  %v2420 = vunpack.c.l.b16 %v2336
  %v2421 = vunpack.c.l.b16 %v2337
  %v2422 = vunpack.c.l.b16 %v2338
  %v2423 = vunpack.c.l.b16 %v2339
  %v2424 = vunpack.c.l.b16 %v2340
  %v2425 = vunpack.c.l.b16 %v2341
  %v2426 = vunpack.c.l.b16 %v2342
  %v2427 = vunpack.c.l.b16 %v2343
  %v2428 = vunpack.c.l.b16 %v2344
  %v2429 = vunpack.c.l.b16 %v2345
  %v2430 = vunpack.c.l.b16 %v2346
  %v2431 = vunpack.c.l.b16 %v2347
  %v2432 = vunpack.c.l.b16 %v2348
  %v2433 = vpack.c.b16 %v2394, %v2393
  %v2434 = vpack.c.b16 %v2396, %v2395
  %v2435 = vpack.c.b16 %v2398, %v2397
  %v2436 = vpack.c.b16 %v2400, %v2399
  %v2437 = vpack.c.b16 %v2402, %v2401
  %v2438 = vpack.c.b16 %v2404, %v2403
  %v2439 = vpack.c.b16 %v2406, %v2405
  %v2440 = vpack.c.b16 %v2408, %v2407
  %v2441 = vpack.c.b16 %v2410, %v2409
  %v2442 = vpack.c.b16 %v2412, %v2411
  %v2443 = vpack.c.b16 %v2414, %v2413
  %v2444 = vpack.c.b16 %v2416, %v2415
  %v2445 = vpack.c.b16 %v2418, %v2417
  %v2446 = vpack.c.b16 %v2420, %v2419
  %v2447 = vpack.c.b16 %v2422, %v2421
  %v2448 = vpack.c.b16 %v2424, %v2423
  %v2449 = vpack.c.b16 %v2426, %v2425
  %v2450 = vpack.c.b16 %v2428, %v2427
  %v2451 = vpack.c.b16 %v2430, %v2429
  %v2452 = vpack.c.b16 %v2432, %v2431
  %vm2473 = vcmask 523264
  %v2475 = vsel %vm2473, %v2308, 0
  %2477 = vmatpush.bf16.msra.mxu0 %v2440
  %2478 = vmatpush.bf16.msra.mxu0 %v2439
  %2479 = vmatpush.bf16.msra.mxu0 %v2438
  %2480 = vmatpush.bf16.msra.mxu0 %v2437
  %2481 = vmatpush.bf16.msra.mxu0 %v2436
  %2482 = vmatpush.bf16.msra.mxu0 %v2435
  %2483 = vmatpush.bf16.msra.mxu0 %v2434
  %2484 = vmatpush.bf16.msra.mxu0 %v2433
  %2485 = vmatmul.bf16.gmra.mxu0 %v2306
  %v2486 = vpop.f32.mrf.mxu0
  %v2487 = vadd.f32 %v2351, %v2486
  %v2488 = vpop.f32.mrf.mxu0
  %2489 = vdwg.mxu0
  %2490 = vmatpush.bf16.msra.mxu0 %v2448
  %2491 = vmatpush.bf16.msra.mxu0 %v2447
  %2492 = vmatpush.bf16.msra.mxu0 %v2446
  %2493 = vmatpush.bf16.msra.mxu0 %v2445
  %2494 = vmatpush.bf16.msra.mxu0 %v2444
  %2495 = vmatpush.bf16.msra.mxu0 %v2443
  %2496 = vmatpush.bf16.msra.mxu0 %v2442
  %2497 = vmatpush.bf16.msra.mxu0 %v2441
  %2498 = vmatmul.bf16.gmra.mxu0 %v2307
  %v2499 = vpop.f32.mrf.mxu0
  %v2500 = vadd.f32 %v2487, %v2499
  %v2501 = vpop.f32.mrf.mxu0
  %2502 = vdwg.mxu0
  %2503 = vmatpush.bf16.msra.mxu0 0
  %2504 = vmatpush.bf16.msra.mxu0 0
  %2505 = vmatpush.bf16.msra.mxu0 0
  %2506 = vmatpush.bf16.msra.mxu0 0
  %2507 = vmatpush.bf16.msra.mxu0 %v2452
  %2508 = vmatpush.bf16.msra.mxu0 %v2451
  %2509 = vmatpush.bf16.msra.mxu0 %v2450
  %2510 = vmatpush.bf16.msra.mxu0 %v2449
  %2511 = vmatmul.bf16.gmra.mxu0 %v2475
  %v2512 = vpop.f32.mrf.mxu0
  %v2513 = vadd.f32 %v2500, %v2512
  %v2514 = vpop.f32.mrf.mxu0
  %2515 = vdwg.mxu0
  %v2516 = vmax.f32 %v2513, 0.0
  %v2517 = vpack.c.bf16 %v2516, %v2516
  %v2518 = vld [vmem:[%s7] sm:$0xf]
  %v2519 = vld [vmem:[%s7 + $0x4] sm:$0xf]
  %v2520 = vld [vmem:[%s7 + $0x8] sm:$0xf]
  %v2521 = vld [vmem:[%s7 + $0xc] sm:$0xf]
  %v2522 = vld [vmem:[%s7 + $0x10] sm:$0xf]
  %v2523 = vld [vmem:[%s7 + $0x14] sm:$0xf]
  %v2524 = vld [vmem:[%s7 + $0x18] sm:$0x1]
  %v2525 = vld [vmem:[%s8] sm:$0x1]
  %v2527 = vperm.slane %v2525, 0
  %v2536 = vunpack.c.l.b16 %v2518
  %v2537 = vunpack.c.l.b16 %v2519
  %v2538 = vunpack.c.l.b16 %v2520
  %v2539 = vunpack.c.l.b16 %v2521
  %v2540 = vunpack.c.l.b16 %v2522
  %v2541 = vunpack.c.l.b16 %v2523
  %v2542 = vunpack.c.l.b16 %v2524
  %v2543 = vpack.c.b16 %v2537, %v2536
  %v2544 = vpack.c.b16 %v2539, %v2538
  %v2545 = vpack.c.b16 %v2541, %v2540
  %v2546 = vpack.c.b16 %v2542, %v2542
  %vm2550 = vcmask 408576
  %v2552 = vsel %vm2550, %v2517, 0
  %vm2554 = vcmask 1040384
  %v2556 = vsel %vm2554, %v2546, 0
  %2558 = vmatpush.bf16.msra.mxu0 0
  %2559 = vmatpush.bf16.msra.mxu0 0
  %2560 = vmatpush.bf16.msra.mxu0 0
  %2561 = vmatpush.bf16.msra.mxu0 0
  %2562 = vmatpush.bf16.msra.mxu0 %v2556
  %2563 = vmatpush.bf16.msra.mxu0 %v2545
  %2564 = vmatpush.bf16.msra.mxu0 %v2544
  %2565 = vmatpush.bf16.msra.mxu0 %v2543
  %2566 = vmatmul.bf16.gmra.mxu0 %v2552
  %v2567 = vpop.f32.mrf.mxu0
  %v2568 = vadd.f32 %v2527, %v2567
  %v2569 = vpop.f32.mrf.mxu0
  %2570 = vdwg.mxu0
  %vm2571 = vcmask 80896
  %v2572 = vsel %vm2571, %v2568, -inf
  %2573 = vmax.xlane.f32.xlu0 %v2572
  %v2574 = vpop.xlane.xlu0 %2573
  %v2575 = vsub.f32 %v2568, %v2574
  %v2576 = vmul.f32 %v2575, 1.442695
  %v2577 = vpow.pop %v2576
  %v2578 = vsel %vm2571, %v2577, 0.0
  %2579 = vadd.xlane.f32.xlu0 %v2578
  %v2580 = vpop.xlane.xlu0 %2579
  %v2581 = vlog2.pop %v2580
  %v2582 = vmul.f32 %v2581, 0.6931472
  %v2583 = vadd.f32 %v2582, %v2574
  %v2584 = vsub.f32 %v2568, %v2583
  %2585 = vst.msk [vmem:[%s9] sm:$0xff] %vm2571, %v2584
  // Predicated region
  $region38: #{neural_network_forward.1} parent=0 // pred_check
    _
  $region39: #{neural_network_forward.1} parent=0 // pred_check_branch
    %2587 = sbr.rel (0) target = $region41
  $region40: #{neural_network_forward.1} parent=0 // pred_region
    _
  $region41: #{neural_network_forward.1} parent=0 // pred_fallthru
    _
  // Predicated region
  $region42: #{neural_network_forward.1} parent=0 // pred_check
    _
  $region43: #{neural_network_forward.1} parent=0 // pred_check_branch
    %2589 = sbr.rel (0) target = $region45
  $region44: #{neural_network_forward.1} parent=0 // pred_region
    _
  $region45: #{neural_network_forward.1} parent=0 // pred_fallthru
    _

</llo_original>
